<compile_context>
chip_gen: v5e
topology: v5e:2x2
jax: 0.10.0
libtpu: 0.0.40
codegen_flags: <defaults>
</compile_context>

<pallas_src>
import functools

import jax
import jax.numpy as jnp
from jax.experimental import pallas as pl
from jax.experimental.pallas import tpu as pltpu


def _round_up(x, m):
    return (x + m - 1) // m * m


# ----------------------------- Pallas kernel ------------------------------ #
def fnn_kernel(idx_ref, tab_ref, w1_ref, b1_ref, w2_ref, b2_ref,
               w3_ref, b3_ref, w4_ref, b4_ref, o_ref):
    """One batch tile. Activations are kept transposed: [features, batch_tile]."""
    nf, bm = idx_ref.shape            # [num_fields, bm] int32 (offsets pre-added)
    d, vpad = tab_ref.shape           # [embed_dim, vocab_pad] f32 (table, transposed)
    H1 = w1_ref.shape[1]              # w1_ref: [num_fields, H1, embed_dim]

    idx = idx_ref[...]                                              # [nf, bm]
    tab = tab_ref[...]                                              # [d, vpad]
    iota_v = jax.lax.broadcasted_iota(jnp.int32, (vpad, bm), 0)

    # Fused FeaturesEmbedding + layer 1: per-field one-hot matmul (vocab is
    # tiny) accumulated directly into the layer-1 result. No xT concat, no
    # dtype casts on the critical chain. All dots are f32 on the MXU.
    h = jnp.zeros((H1, bm), jnp.float32)
    for f in range(nf):                                             # nf small & static
        onehot = (iota_v == idx[f:f + 1, :]).astype(jnp.float32)    # bool -> f32
        emb_f = jnp.dot(tab, onehot,
                        preferred_element_type=jnp.float32)         # [d, bm]
        h = h + jnp.dot(w1_ref[f], emb_f,
                        preferred_element_type=jnp.float32)         # [H1, bm]
    h = jnp.maximum(h + b1_ref[...], 0.0)                           # [H1, bm]

    # Remaining MLP layers, transposed: h = relu(W^T @ h + b), f32 throughout.
    h = jnp.dot(w2_ref[...], h, preferred_element_type=jnp.float32)
    h = jnp.maximum(h + b2_ref[...], 0.0)                           # [H2, bm]
    h = jnp.dot(w3_ref[...], h, preferred_element_type=jnp.float32)
    h = jnp.maximum(h + b3_ref[...], 0.0)                           # [H3, bm]

    # Final 64 -> 1 layer: VPU multiply + sublane reduce (skips an N=1 MXU pass)
    out = jnp.sum(h * w4_ref[...], axis=0, keepdims=True) + b4_ref[...]   # [1, bm]
    o_ref[...] = out.astype(o_ref.dtype)                            # lane-dense row


def fnn_pallas(idxT, tabT, w1f, b1, w2T, b2, w3T, b3, w4, b4, *, block_m):
    """idxT: [num_fields, B_pad] int32 (offsets added).  Returns [1, B_pad] f32."""
    nf, B_pad = idxT.shape
    d, vpad = tabT.shape
    _, H1, _ = w1f.shape
    H2 = w2T.shape[0]
    H3 = w3T.shape[0]
    bm = block_m
    assert B_pad % bm == 0
    grid = (B_pad // bm,)

    full2 = lambda shape: pl.BlockSpec(shape, lambda i: (0, 0))

    flops = 2 * B_pad * (nf * (d * vpad + H1 * d) + H1 * H2 + H2 * H3 + H3)
    bytes_accessed = (idxT.size * 4 + tabT.size * 4
                      + (w1f.size + w2T.size + w3T.size) * 4
                      + (b1.size + b2.size + b3.size + w4.size + b4.size) * 4
                      + B_pad * 4)

    return pl.pallas_call(
        fnn_kernel,
        out_shape=jax.ShapeDtypeStruct((1, B_pad), jnp.float32),
        grid=grid,
        in_specs=[
            pl.BlockSpec((nf, bm), lambda i: (0, i)),      # indices, tiled on batch (lanes)
            full2((d, vpad)),                              # embedding table (resident)
            pl.BlockSpec((nf, H1, d), lambda i: (0, 0, 0)),  # layer-1 weights, per-field
            full2((H1, 1)),                                # b1
            full2((H2, H1)), full2((H2, 1)),               # layer 2
            full2((H3, H2)), full2((H3, 1)),               # layer 3
            full2((H3, 1)), full2((1, 1)),                 # final layer (w4, b4)
        ],
        out_specs=pl.BlockSpec((1, bm), lambda i: (0, i)),   # lane-dense output row
        compiler_params=pltpu.CompilerParams(
            dimension_semantics=("parallel",)),
        cost_estimate=pl.CostEstimate(
            flops=flops, transcendentals=0, bytes_accessed=bytes_accessed),
    )(idxT, tabT, w1f, b1, w2T, b2, w3T, b3, w4, b4)


# ------------------------------ Model (glue) ------------------------------ #
def init_params(key, field_dims, embed_dim, mlp_layers=(256, 128, 64)):
    num_fields = len(field_dims)
    vocab = int(sum(field_dims))
    d0 = num_fields * embed_dim
    dims = [d0, *mlp_layers, 1]

    keys = jax.random.split(key, 1 + 2 * (len(dims) - 1))
    params = {
        "embedding": 0.05 * jax.random.normal(keys[0], (vocab, embed_dim), jnp.float32),
        "offsets": jnp.asarray(
            [0] + list(jnp.cumsum(jnp.asarray(field_dims[:-1], jnp.int32)).tolist()),
            jnp.int32),
    }
    k = 1
    for li, (din, dout) in enumerate(zip(dims[:-1], dims[1:]), start=1):
        scale = 1.0 / jnp.sqrt(jnp.float32(din))
        params[f"w{li}"] = scale * jax.random.normal(keys[k], (din, dout), jnp.float32)
        params[f"b{li}"] = scale * jax.random.normal(keys[k + 1], (1, dout), jnp.float32)
        k += 2
    return params


@functools.partial(jax.jit, static_argnames=("block_m",))
def fnn_forward(x, params, block_m=1024):
    """x: [B, num_fields] int32 -> [B, 1] f32."""
    B, nf = x.shape
    table = params["embedding"]                       # [vocab, embed_dim] f32
    vocab, d = table.shape
    vpad = _round_up(vocab, 128)

    # Batch tile: big (amortizes ~0.35us/step grid overhead), 128-aligned.
    bm = min(block_m, _round_up(B, 128))
    B_pad = _round_up(B, bm)
    # If the whole batch fits in one tile, split into >=2 tiles so the
    # "parallel" axis can shard across both v7x TensorCores (VMEM is tiny).
    if B_pad // bm < 2:
        half = (B_pad // 2) // 128 * 128
        if half >= 128:
            bm = half
            B_pad = _round_up(B, bm)

    # FeaturesEmbedding offsets; lay indices out as [num_fields, B_pad] (batch on lanes).
    idx = x + params["offsets"][None, :]              # [B, nf] int32
    idxT = jnp.pad(idx.T, ((0, 0), (0, B_pad - B)))   # padded cols use index 0, trimmed

    # Transposed f32 weights / table (tiny host-side prep, fused by XLA).
    tabT = jnp.pad(table, ((0, vpad - vocab), (0, 0))).T          # [d, vpad] f32
    H1 = params["w1"].shape[1]
    # Layer-1 weights split per field: [num_fields, H1, embed_dim]
    w1f = params["w1"].T.reshape(H1, nf, d).transpose(1, 0, 2)
    w2T = params["w2"].T                              # [H2, H1]
    w3T = params["w3"].T                              # [H3, H2]
    b1 = params["b1"].T                               # [H1, 1]
    b2 = params["b2"].T
    b3 = params["b3"].T
    w4 = params["w4"]                                 # [H3, 1]
    b4 = params["b4"]                                 # [1, 1]

    out_row = fnn_pallas(idxT, tabT, w1f, b1, w2T, b2, w3T, b3, w4, b4, block_m=bm)
    return out_row[0, :B].reshape(B, 1)


def fnn_reference(x, params):
    idx = x + params["offsets"][None, :]
    h = jnp.take(params["embedding"], idx, axis=0).reshape(x.shape[0], -1)
    h = jnp.maximum(h @ params["w1"] + params["b1"], 0.0)
    h = jnp.maximum(h @ params["w2"] + params["b2"], 0.0)
    h = jnp.maximum(h @ params["w3"] + params["b3"], 0.0)
    return h @ params["w4"] + params["b4"]


# --------------------------------- main ----------------------------------- #
if __name__ == "__main__":
    field_dims = (10, 20, 30, 40)   # 4 categorical fields
    embed_dim = 16                  # -> mlp_input_dim = 64
    batch = 8

    key = jax.random.PRNGKey(0)
    pkey, xkey = jax.random.split(key)
    params = init_params(pkey, field_dims, embed_dim)

    # deterministic example input: [B, num_fields] int32 indices, each < field_dims[f]
    maxes = jnp.asarray(field_dims, jnp.int32)[None, :]
    x = (jax.random.randint(xkey, (batch, len(field_dims)), 0, 1 << 15, jnp.int32)
         % maxes).astype(jnp.int32)

    out = fnn_forward(x, params)
    out = jax.block_until_ready(out)

    ref = fnn_reference(x, params)
    assert out.shape == (batch, 1), out.shape
    assert jnp.allclose(out, ref, atol=1e-3, rtol=1e-2), "mismatch vs reference"

    print("KERNEL_OK")
</pallas_src>

<mosaic_0001>
module attributes {stable_mosaic.version = 11 : i64} {
  func.func @fnn_kernel(%arg0: i32, %arg1: memref<4x128xi32, #tpu.memory_space<vmem>>, %arg2: memref<16x128xf32, #tpu.memory_space<vmem>>, %arg3: memref<4x256x16xf32, #tpu.memory_space<vmem>>, %arg4: memref<256x1xf32, #tpu.memory_space<vmem>>, %arg5: memref<128x256xf32, #tpu.memory_space<vmem>>, %arg6: memref<128x1xf32, #tpu.memory_space<vmem>>, %arg7: memref<64x128xf32, #tpu.memory_space<vmem>>, %arg8: memref<64x1xf32, #tpu.memory_space<vmem>>, %arg9: memref<64x1xf32, #tpu.memory_space<vmem>>, %arg10: memref<1x1xf32, #tpu.memory_space<vmem>>, %arg11: memref<1x128xf32, #tpu.memory_space<vmem>>) attributes {dimension_semantics = [#tpu.dimension_semantics<parallel>], iteration_bounds = array<i64: 1>, scalar_prefetch = 0 : i64, scratch_operands = 0 : i64, tpu.core_type = #tpu.core_type<tc>, window_params = [{transform_indices = @transform_0, window_bounds = array<i64: 4, 128>}, {pipeline_mode = #tpu.pipeline_mode<synchronous>, transform_indices = @transform_1, window_bounds = array<i64: 16, 128>}, {pipeline_mode = #tpu.pipeline_mode<synchronous>, transform_indices = @transform_2, window_bounds = array<i64: 4, 256, 16>}, {pipeline_mode = #tpu.pipeline_mode<synchronous>, transform_indices = @transform_3, window_bounds = array<i64: 256, 1>}, {pipeline_mode = #tpu.pipeline_mode<synchronous>, transform_indices = @transform_4, window_bounds = array<i64: 128, 256>}, {pipeline_mode = #tpu.pipeline_mode<synchronous>, transform_indices = @transform_5, window_bounds = array<i64: 128, 1>}, {pipeline_mode = #tpu.pipeline_mode<synchronous>, transform_indices = @transform_6, window_bounds = array<i64: 64, 128>}, {pipeline_mode = #tpu.pipeline_mode<synchronous>, transform_indices = @transform_7, window_bounds = array<i64: 64, 1>}, {pipeline_mode = #tpu.pipeline_mode<synchronous>, transform_indices = @transform_8, window_bounds = array<i64: 64, 1>}, {pipeline_mode = #tpu.pipeline_mode<synchronous>, transform_indices = @transform_9, window_bounds = array<i64: 1, 1>}, {transform_indices = @transform_10, window_bounds = array<i64: 1, 128>}]} {
    %c0 = arith.constant 0 : index
    %c0_0 = arith.constant 0 : index
    %0 = vector.load %arg1[%c0, %c0_0] : memref<4x128xi32, #tpu.memory_space<vmem>>, vector<4x128xi32>
    %c0_1 = arith.constant 0 : index
    %c0_2 = arith.constant 0 : index
    %1 = vector.load %arg2[%c0_1, %c0_2] : memref<16x128xf32, #tpu.memory_space<vmem>>, vector<16x128xf32>
    %2 = tpu.iota {dimensions = array<i32: 0>} : vector<128x128xi32>
    %cst = arith.constant 0.000000e+00 : f32
    %3 = vector.broadcast %cst : f32 to vector<256x128xf32>
    %4 = vector.extract_strided_slice %0 {offsets = [0, 0], sizes = [1, 128], strides = [1, 1]} : vector<4x128xi32> to vector<1x128xi32>
    %5 = vector.broadcast %4 : vector<1x128xi32> to vector<128x128xi32>
    %6 = arith.cmpi eq, %2, %5 : vector<128x128xi32>
    %7 = arith.extui %6 : vector<128x128xi1> to vector<128x128xi32>
    %8 = arith.sitofp %7 : vector<128x128xi32> to vector<128x128xf32>
    %cst_3 = arith.constant dense<0.000000e+00> : vector<16x128xf32>
    %9 = tpu.matmul %1, %8, %cst_3 {dimension_numbers = #tpu.dot_dimension_numbers<[1], [0], [0], [1], [0, 0, 1, 1], [], []>} : vector<16x128xf32>, vector<128x128xf32>, vector<16x128xf32> -> vector<16x128xf32>
    %c0_4 = arith.constant 0 : index
    %c0_5 = arith.constant 0 : index
    %c0_6 = arith.constant 0 : index
    %10 = vector.load %arg3[%c0_4, %c0_5, %c0_6] : memref<4x256x16xf32, #tpu.memory_space<vmem>>, vector<1x256x16xf32>
    %11 = vector.shape_cast %10 : vector<1x256x16xf32> to vector<256x16xf32>
    %cst_7 = arith.constant dense<0.000000e+00> : vector<256x128xf32>
    %12 = tpu.matmul %11, %9, %cst_7 {dimension_numbers = #tpu.dot_dimension_numbers<[1], [0], [0], [1], [0, 0, 1, 1], [], []>} : vector<256x16xf32>, vector<16x128xf32>, vector<256x128xf32> -> vector<256x128xf32>
    %13 = arith.addf %3, %12 : vector<256x128xf32>
    %14 = vector.extract_strided_slice %0 {offsets = [1, 0], sizes = [1, 128], strides = [1, 1]} : vector<4x128xi32> to vector<1x128xi32>
    %15 = vector.broadcast %14 : vector<1x128xi32> to vector<128x128xi32>
    %16 = arith.cmpi eq, %2, %15 : vector<128x128xi32>
    %17 = arith.extui %16 : vector<128x128xi1> to vector<128x128xi32>
    %18 = arith.sitofp %17 : vector<128x128xi32> to vector<128x128xf32>
    %cst_8 = arith.constant dense<0.000000e+00> : vector<16x128xf32>
    %19 = tpu.matmul %1, %18, %cst_8 {dimension_numbers = #tpu.dot_dimension_numbers<[1], [0], [0], [1], [0, 0, 1, 1], [], []>} : vector<16x128xf32>, vector<128x128xf32>, vector<16x128xf32> -> vector<16x128xf32>
    %c1 = arith.constant 1 : index
    %c0_9 = arith.constant 0 : index
    %c0_10 = arith.constant 0 : index
    %20 = vector.load %arg3[%c1, %c0_9, %c0_10] : memref<4x256x16xf32, #tpu.memory_space<vmem>>, vector<1x256x16xf32>
    %21 = vector.shape_cast %20 : vector<1x256x16xf32> to vector<256x16xf32>
    %cst_11 = arith.constant dense<0.000000e+00> : vector<256x128xf32>
    %22 = tpu.matmul %21, %19, %cst_11 {dimension_numbers = #tpu.dot_dimension_numbers<[1], [0], [0], [1], [0, 0, 1, 1], [], []>} : vector<256x16xf32>, vector<16x128xf32>, vector<256x128xf32> -> vector<256x128xf32>
    %23 = arith.addf %13, %22 : vector<256x128xf32>
    %24 = vector.extract_strided_slice %0 {offsets = [2, 0], sizes = [1, 128], strides = [1, 1]} : vector<4x128xi32> to vector<1x128xi32>
    %25 = vector.broadcast %24 : vector<1x128xi32> to vector<128x128xi32>
    %26 = arith.cmpi eq, %2, %25 : vector<128x128xi32>
    %27 = arith.extui %26 : vector<128x128xi1> to vector<128x128xi32>
    %28 = arith.sitofp %27 : vector<128x128xi32> to vector<128x128xf32>
    %cst_12 = arith.constant dense<0.000000e+00> : vector<16x128xf32>
    %29 = tpu.matmul %1, %28, %cst_12 {dimension_numbers = #tpu.dot_dimension_numbers<[1], [0], [0], [1], [0, 0, 1, 1], [], []>} : vector<16x128xf32>, vector<128x128xf32>, vector<16x128xf32> -> vector<16x128xf32>
    %c2 = arith.constant 2 : index
    %c0_13 = arith.constant 0 : index
    %c0_14 = arith.constant 0 : index
    %30 = vector.load %arg3[%c2, %c0_13, %c0_14] : memref<4x256x16xf32, #tpu.memory_space<vmem>>, vector<1x256x16xf32>
    %31 = vector.shape_cast %30 : vector<1x256x16xf32> to vector<256x16xf32>
    %cst_15 = arith.constant dense<0.000000e+00> : vector<256x128xf32>
    %32 = tpu.matmul %31, %29, %cst_15 {dimension_numbers = #tpu.dot_dimension_numbers<[1], [0], [0], [1], [0, 0, 1, 1], [], []>} : vector<256x16xf32>, vector<16x128xf32>, vector<256x128xf32> -> vector<256x128xf32>
    %33 = arith.addf %23, %32 : vector<256x128xf32>
    %34 = vector.extract_strided_slice %0 {offsets = [3, 0], sizes = [1, 128], strides = [1, 1]} : vector<4x128xi32> to vector<1x128xi32>
    %35 = vector.broadcast %34 : vector<1x128xi32> to vector<128x128xi32>
    %36 = arith.cmpi eq, %2, %35 : vector<128x128xi32>
    %37 = arith.extui %36 : vector<128x128xi1> to vector<128x128xi32>
    %38 = arith.sitofp %37 : vector<128x128xi32> to vector<128x128xf32>
    %cst_16 = arith.constant dense<0.000000e+00> : vector<16x128xf32>
    %39 = tpu.matmul %1, %38, %cst_16 {dimension_numbers = #tpu.dot_dimension_numbers<[1], [0], [0], [1], [0, 0, 1, 1], [], []>} : vector<16x128xf32>, vector<128x128xf32>, vector<16x128xf32> -> vector<16x128xf32>
    %c3 = arith.constant 3 : index
    %c0_17 = arith.constant 0 : index
    %c0_18 = arith.constant 0 : index
    %40 = vector.load %arg3[%c3, %c0_17, %c0_18] : memref<4x256x16xf32, #tpu.memory_space<vmem>>, vector<1x256x16xf32>
    %41 = vector.shape_cast %40 : vector<1x256x16xf32> to vector<256x16xf32>
    %cst_19 = arith.constant dense<0.000000e+00> : vector<256x128xf32>
    %42 = tpu.matmul %41, %39, %cst_19 {dimension_numbers = #tpu.dot_dimension_numbers<[1], [0], [0], [1], [0, 0, 1, 1], [], []>} : vector<256x16xf32>, vector<16x128xf32>, vector<256x128xf32> -> vector<256x128xf32>
    %43 = arith.addf %33, %42 : vector<256x128xf32>
    %c0_20 = arith.constant 0 : index
    %c0_21 = arith.constant 0 : index
    %44 = vector.load %arg4[%c0_20, %c0_21] : memref<256x1xf32, #tpu.memory_space<vmem>>, vector<256x1xf32>
    %45 = vector.broadcast %44 : vector<256x1xf32> to vector<256x128xf32>
    %46 = arith.addf %43, %45 : vector<256x128xf32>
    %cst_22 = arith.constant 0.000000e+00 : f32
    %47 = vector.broadcast %cst_22 : f32 to vector<256x128xf32>
    %48 = arith.maximumf %46, %47 : vector<256x128xf32>
    %c0_23 = arith.constant 0 : index
    %c0_24 = arith.constant 0 : index
    %49 = vector.load %arg5[%c0_23, %c0_24] : memref<128x256xf32, #tpu.memory_space<vmem>>, vector<128x256xf32>
    %cst_25 = arith.constant dense<0.000000e+00> : vector<128x128xf32>
    %50 = tpu.matmul %49, %48, %cst_25 {dimension_numbers = #tpu.dot_dimension_numbers<[1], [0], [0], [1], [0, 0, 1, 1], [], []>} : vector<128x256xf32>, vector<256x128xf32>, vector<128x128xf32> -> vector<128x128xf32>
    %c0_26 = arith.constant 0 : index
    %c0_27 = arith.constant 0 : index
    %51 = vector.load %arg6[%c0_26, %c0_27] : memref<128x1xf32, #tpu.memory_space<vmem>>, vector<128x1xf32>
    %52 = vector.broadcast %51 : vector<128x1xf32> to vector<128x128xf32>
    %53 = arith.addf %50, %52 : vector<128x128xf32>
    %cst_28 = arith.constant 0.000000e+00 : f32
    %54 = vector.broadcast %cst_28 : f32 to vector<128x128xf32>
    %55 = arith.maximumf %53, %54 : vector<128x128xf32>
    %c0_29 = arith.constant 0 : index
    %c0_30 = arith.constant 0 : index
    %56 = vector.load %arg7[%c0_29, %c0_30] : memref<64x128xf32, #tpu.memory_space<vmem>>, vector<64x128xf32>
    %cst_31 = arith.constant dense<0.000000e+00> : vector<64x128xf32>
    %57 = tpu.matmul %56, %55, %cst_31 {dimension_numbers = #tpu.dot_dimension_numbers<[1], [0], [0], [1], [0, 0, 1, 1], [], []>} : vector<64x128xf32>, vector<128x128xf32>, vector<64x128xf32> -> vector<64x128xf32>
    %c0_32 = arith.constant 0 : index
    %c0_33 = arith.constant 0 : index
    %58 = vector.load %arg8[%c0_32, %c0_33] : memref<64x1xf32, #tpu.memory_space<vmem>>, vector<64x1xf32>
    %59 = vector.broadcast %58 : vector<64x1xf32> to vector<64x128xf32>
    %60 = arith.addf %57, %59 : vector<64x128xf32>
    %cst_34 = arith.constant 0.000000e+00 : f32
    %61 = vector.broadcast %cst_34 : f32 to vector<64x128xf32>
    %62 = arith.maximumf %60, %61 : vector<64x128xf32>
    %c0_35 = arith.constant 0 : index
    %c0_36 = arith.constant 0 : index
    %63 = vector.load %arg9[%c0_35, %c0_36] : memref<64x1xf32, #tpu.memory_space<vmem>>, vector<64x1xf32>
    %64 = vector.broadcast %63 : vector<64x1xf32> to vector<64x128xf32>
    %65 = arith.mulf %62, %64 : vector<64x128xf32>
    %cst_37 = arith.constant dense<0.000000e+00> : vector<128xf32>
    %66 = vector.multi_reduction <add>, %65, %cst_37 [0] : vector<64x128xf32> to vector<128xf32>
    %67 = vector.shape_cast %66 : vector<128xf32> to vector<1x128xf32>
    %c0_38 = arith.constant 0 : index
    %c0_39 = arith.constant 0 : index
    %68 = vector.load %arg10[%c0_38, %c0_39] : memref<1x1xf32, #tpu.memory_space<vmem>>, vector<1x1xf32>
    %69 = vector.broadcast %68 : vector<1x1xf32> to vector<1x128xf32>
    %70 = arith.addf %67, %69 : vector<1x128xf32>
    %c0_40 = arith.constant 0 : index
    %c0_41 = arith.constant 0 : index
    %71 = vector.load %arg11[%c0_40, %c0_41] : memref<1x128xf32, #tpu.memory_space<vmem>>, vector<1x128xf32>
    tpu.vector_store %arg11[%c0_40, %c0_41], %70 {strides = array<i32>} : memref<1x128xf32, #tpu.memory_space<vmem>>, vector<1x128xf32>,
    return
  }
  func.func @transform_0(%arg0: i32) -> (i32, i32) {
    %c0_i32 = arith.constant 0 : i32
    %c0_i32_0 = arith.constant 0 : i32
    return %c0_i32, %arg0 : i32, i32
  }
  func.func @transform_1(%arg0: i32) -> (i32, i32) {
    %c0_i32 = arith.constant 0 : i32
    %c0_i32_0 = arith.constant 0 : i32
    %c0_i32_1 = arith.constant 0 : i32
    return %c0_i32, %c0_i32_0 : i32, i32
  }
  func.func @transform_2(%arg0: i32) -> (i32, i32, i32) {
    %c0_i32 = arith.constant 0 : i32
    %c0_i32_0 = arith.constant 0 : i32
    %c0_i32_1 = arith.constant 0 : i32
    %c0_i32_2 = arith.constant 0 : i32
    return %c0_i32, %c0_i32_0, %c0_i32_1 : i32, i32, i32
  }
  func.func @transform_3(%arg0: i32) -> (i32, i32) {
    %c0_i32 = arith.constant 0 : i32
    %c0_i32_0 = arith.constant 0 : i32
    %c0_i32_1 = arith.constant 0 : i32
    return %c0_i32, %c0_i32_0 : i32, i32
  }
  func.func @transform_4(%arg0: i32) -> (i32, i32) {
    %c0_i32 = arith.constant 0 : i32
    %c0_i32_0 = arith.constant 0 : i32
    %c0_i32_1 = arith.constant 0 : i32
    return %c0_i32, %c0_i32_0 : i32, i32
  }
  func.func @transform_5(%arg0: i32) -> (i32, i32) {
    %c0_i32 = arith.constant 0 : i32
    %c0_i32_0 = arith.constant 0 : i32
    %c0_i32_1 = arith.constant 0 : i32
    return %c0_i32, %c0_i32_0 : i32, i32
  }
  func.func @transform_6(%arg0: i32) -> (i32, i32) {
    %c0_i32 = arith.constant 0 : i32
    %c0_i32_0 = arith.constant 0 : i32
    %c0_i32_1 = arith.constant 0 : i32
    return %c0_i32, %c0_i32_0 : i32, i32
  }
  func.func @transform_7(%arg0: i32) -> (i32, i32) {
    %c0_i32 = arith.constant 0 : i32
    %c0_i32_0 = arith.constant 0 : i32
    %c0_i32_1 = arith.constant 0 : i32
    return %c0_i32, %c0_i32_0 : i32, i32
  }
  func.func @transform_8(%arg0: i32) -> (i32, i32) {
    %c0_i32 = arith.constant 0 : i32
    %c0_i32_0 = arith.constant 0 : i32
    %c0_i32_1 = arith.constant 0 : i32
    return %c0_i32, %c0_i32_0 : i32, i32
  }
  func.func @transform_9(%arg0: i32) -> (i32, i32) {
    %c0_i32 = arith.constant 0 : i32
    %c0_i32_0 = arith.constant 0 : i32
    %c0_i32_1 = arith.constant 0 : i32
    return %c0_i32, %c0_i32_0 : i32, i32
  }
  func.func @transform_10(%arg0: i32) -> (i32, i32) {
    %c0_i32 = arith.constant 0 : i32
    %c0_i32_0 = arith.constant 0 : i32
    return %c0_i32, %arg0 : i32, i32
  }
}

</mosaic_0001>

<llo_original>
// kernel: fnn_forward.1
$region0: #{fnn_forward.1}
  #allocation0 [shape = 'u32[]', space=smem, size = 0x4, offset = 0x4, fixed_abs, tag = 'smem constant byte address 0x4 - core index']
  #allocation1 [shape = 'u32[72,128]{1,0:T(1,128)}', space=vmem, size = 0x9000, scoped, tag = 'internal scratch']
  #allocation2 [shape = 'f32[1,1]{1,0:T(1,128)S(1)}', space=vmem, size = 0x200, scoped, tag = 'scoped memory for fnn_forward.1']
  %s0 = inlined_call_operand.vmem [shape: s32[4,128], index: 0, kind: input, shape index: {}]
  %s1 = inlined_call_operand.vmem [shape: f32[16,128], index: 1, kind: input, shape index: {}]
  %s2 = inlined_call_operand.vmem [shape: f32[4,256,16], index: 2, kind: input, shape index: {}]
  %s3 = inlined_call_operand.vmem [shape: f32[256,1], index: 3, kind: input, shape index: {}]
  %s4 = inlined_call_operand.vmem [shape: f32[128,256], index: 4, kind: input, shape index: {}]
  %s5 = inlined_call_operand.vmem [shape: f32[128,1], index: 5, kind: input, shape index: {}]
  %s6 = inlined_call_operand.vmem [shape: f32[64,128], index: 6, kind: input, shape index: {}]
  %s7 = inlined_call_operand.vmem [shape: f32[64,1], index: 7, kind: input, shape index: {}]
  %s8 = inlined_call_operand.vmem [shape: f32[64,1], index: 8, kind: input, shape index: {}]
  %s9 = inlined_call_operand.<no memory space> [shape: f32[1,1], index: 9, kind: input, shape index: {}]
  %s10 = inlined_call_operand.vmem [shape: f32[1,128], index: 10, kind: output, shape index: {}]
  %s11 = sld [smem:[#allocation0]]
  $region50: #{fnn_forward.1} parent=0
    _
  %s13 = ssub.s32 1, %s11
  %s14 = scalar_select 0, %s13, %s11
  %v15 = vstv %s9
  %16 = vst [vmem:[#allocation2] sm:$0x1] %v15
  // Predicated region
  $region2: #{fnn_forward.1} parent=0 // pred_check
    _
  $region3: #{fnn_forward.1} parent=0 // pred_check_branch
    %18 = sbr.rel (0) target = $region5
  $region4: #{fnn_forward.1} parent=0 // pred_region
    _
  $region5: #{fnn_forward.1} parent=0 // pred_fallthru
    _
  // Predicated region
  $region6: #{fnn_forward.1} parent=0 // pred_check
    _
  $region7: #{fnn_forward.1} parent=0 // pred_check_branch
    %20 = sbr.rel (0) target = $region9
  $region8: #{fnn_forward.1} parent=0 // pred_region
    _
  $region9: #{fnn_forward.1} parent=0 // pred_fallthru
    _
  // Predicated region
  $region10: #{fnn_forward.1} parent=0 // pred_check
    _
  $region11: #{fnn_forward.1} parent=0 // pred_check_branch
    %22 = sbr.rel (0) target = $region13
  $region12: #{fnn_forward.1} parent=0 // pred_region
    _
  $region13: #{fnn_forward.1} parent=0 // pred_fallthru
    _
  // Predicated region
  $region14: #{fnn_forward.1} parent=0 // pred_check
    _
  $region15: #{fnn_forward.1} parent=0 // pred_check_branch
    %24 = sbr.rel (0) target = $region17
  $region16: #{fnn_forward.1} parent=0 // pred_region
    _
  $region17: #{fnn_forward.1} parent=0 // pred_fallthru
    _
  // Predicated region
  $region18: #{fnn_forward.1} parent=0 // pred_check
    _
  $region19: #{fnn_forward.1} parent=0 // pred_check_branch
    %26 = sbr.rel (0) target = $region21
  $region20: #{fnn_forward.1} parent=0 // pred_region
    _
  $region21: #{fnn_forward.1} parent=0 // pred_fallthru
    _
  // Predicated region
  $region22: #{fnn_forward.1} parent=0 // pred_check
    _
  $region23: #{fnn_forward.1} parent=0 // pred_check_branch
    %28 = sbr.rel (0) target = $region25
  $region24: #{fnn_forward.1} parent=0 // pred_region
    _
  $region25: #{fnn_forward.1} parent=0 // pred_fallthru
    _
  // Predicated region
  $region26: #{fnn_forward.1} parent=0 // pred_check
    _
  $region27: #{fnn_forward.1} parent=0 // pred_check_branch
    %30 = sbr.rel (0) target = $region29
  $region28: #{fnn_forward.1} parent=0 // pred_region
    _
  $region29: #{fnn_forward.1} parent=0 // pred_fallthru
    _
  // Predicated region
  $region30: #{fnn_forward.1} parent=0 // pred_check
    _
  $region31: #{fnn_forward.1} parent=0 // pred_check_branch
    %32 = sbr.rel (0) target = $region33
  $region32: #{fnn_forward.1} parent=0 // pred_region
    _
  $region33: #{fnn_forward.1} parent=0 // pred_fallthru
    _
  // Predicated region
  $region34: #{fnn_forward.1} parent=0 // pred_check
    _
  $region35: #{fnn_forward.1} parent=0 // pred_check_branch
    %34 = sbr.rel (0) target = $region37
  $region36: #{fnn_forward.1} parent=0 // pred_region
    _
  $region37: #{fnn_forward.1} parent=0 // pred_fallthru
    _
  // Predicated region
  $region38: #{fnn_forward.1} parent=0 // pred_check
    _
  $region39: #{fnn_forward.1} parent=0 // pred_check_branch
    %36 = sbr.rel (0) target = $region41
  $region40: #{fnn_forward.1} parent=0 // pred_region
    _
  $region41: #{fnn_forward.1} parent=0 // pred_fallthru
    _
  %v37 = vld [vmem:[%s0] sm:$0xf]
  %v38 = vld [vmem:[%s1] sm:$0xff]
  %v39 = vld [vmem:[%s1 + $0x8] sm:$0xff]
  %v40 = vlaneseq
  %v41 = vshrl.u32 %v40, 7
  %v42 = vadd.s32 %v41, 8
  %v43 = vadd.s32 %v41, 16
  %v44 = vadd.s32 %v41, 24
  %v45 = vadd.s32 %v41, 32
  %v46 = vadd.s32 %v41, 40
  %v47 = vadd.s32 %v41, 48
  %v48 = vadd.s32 %v41, 56
  %v49 = vadd.s32 %v41, 64
  %v50 = vadd.s32 %v41, 72
  %v51 = vadd.s32 %v41, 80
  %v52 = vadd.s32 %v41, 88
  %v53 = vadd.s32 %v41, 96
  %v54 = vadd.s32 %v41, 104
  %v55 = vadd.s32 %v41, 112
  %v56 = vadd.s32 %v41, 120
  %v57 = vperm.slane %v37, 0
  %vm58 = vcmp.eq.s32.totalorder %v41, %v57
  %vm59 = vcmp.eq.s32.totalorder %v42, %v57
  %vm60 = vcmp.eq.s32.totalorder %v43, %v57
  %vm61 = vcmp.eq.s32.totalorder %v44, %v57
  %vm62 = vcmp.eq.s32.totalorder %v45, %v57
  %vm63 = vcmp.eq.s32.totalorder %v46, %v57
  %vm64 = vcmp.eq.s32.totalorder %v47, %v57
  %vm65 = vcmp.eq.s32.totalorder %v48, %v57
  %vm66 = vcmp.eq.s32.totalorder %v49, %v57
  %vm67 = vcmp.eq.s32.totalorder %v50, %v57
  %vm68 = vcmp.eq.s32.totalorder %v51, %v57
  %vm69 = vcmp.eq.s32.totalorder %v52, %v57
  %vm70 = vcmp.eq.s32.totalorder %v53, %v57
  %vm71 = vcmp.eq.s32.totalorder %v54, %v57
  %vm72 = vcmp.eq.s32.totalorder %v55, %v57
  %vm73 = vcmp.eq.s32.totalorder %v56, %v57
  %v74 = vsel %vm58, 1, 0
  %v75 = vsel %vm59, 1, 0
  %v76 = vsel %vm60, 1, 0
  %v77 = vsel %vm61, 1, 0
  %v78 = vsel %vm62, 1, 0
  %v79 = vsel %vm63, 1, 0
  %v80 = vsel %vm64, 1, 0
  %v81 = vsel %vm65, 1, 0
  %v82 = vsel %vm66, 1, 0
  %v83 = vsel %vm67, 1, 0
  %v84 = vsel %vm68, 1, 0
  %v85 = vsel %vm69, 1, 0
  %v86 = vsel %vm70, 1, 0
  %v87 = vsel %vm71, 1, 0
  %v88 = vsel %vm72, 1, 0
  %v89 = vsel %vm73, 1, 0
  %v90 = vcvt.s32.f32 %v74
  %v91 = vcvt.s32.f32 %v75
  %v92 = vcvt.s32.f32 %v76
  %v93 = vcvt.s32.f32 %v77
  %v94 = vcvt.s32.f32 %v78
  %v95 = vcvt.s32.f32 %v79
  %v96 = vcvt.s32.f32 %v80
  %v97 = vcvt.s32.f32 %v81
  %v98 = vcvt.s32.f32 %v82
  %v99 = vcvt.s32.f32 %v83
  %v100 = vcvt.s32.f32 %v84
  %v101 = vcvt.s32.f32 %v85
  %v102 = vcvt.s32.f32 %v86
  %v103 = vcvt.s32.f32 %v87
  %v104 = vcvt.s32.f32 %v88
  %v105 = vcvt.s32.f32 %v89
  %106 = vmatpush.msra.mxu0 %v105
  %107 = vmatpush.msra.mxu0 %v104
  %108 = vmatpush.msra.mxu0 %v103
  %109 = vmatpush.msra.mxu0 %v102
  %110 = vmatpush.msra.mxu0 %v101
  %111 = vmatpush.msra.mxu0 %v100
  %112 = vmatpush.msra.mxu0 %v99
  %113 = vmatpush.msra.mxu0 %v98
  %114 = vmatpush.msra.mxu0 %v97
  %115 = vmatpush.msra.mxu0 %v96
  %116 = vmatpush.msra.mxu0 %v95
  %117 = vmatpush.msra.mxu0 %v94
  %118 = vmatpush.msra.mxu0 %v93
  %119 = vmatpush.msra.mxu0 %v92
  %120 = vmatpush.msra.mxu0 %v91
  %121 = vmatpush.msra.mxu0 %v90
  %122 = vmatmul.f32.gmra.mxu0 %v38
  %v123 = vpop.f32.mrf.mxu0
  %v124 = vadd.f32 0.0, %v123
  %125 = vmatmul.f32.gmra.mxu0 %v39
  %v126 = vpop.f32.mrf.mxu0
  %v127 = vadd.f32 0.0, %v126
  %128 = vdwg.mxu0
  %v129 = vld [vmem:[%s2] sm:$0xff]
  %v130 = vld [vmem:[%s2 + $0x8] sm:$0xff]
  %v131 = vld [vmem:[%s2 + $0x10] sm:$0xff]
  %v132 = vld [vmem:[%s2 + $0x18] sm:$0xff]
  %v133 = vld [vmem:[%s2 + $0x20] sm:$0xff]
  %v134 = vld [vmem:[%s2 + $0x28] sm:$0xff]
  %v135 = vld [vmem:[%s2 + $0x30] sm:$0xff]
  %v136 = vld [vmem:[%s2 + $0x38] sm:$0xff]
  %v137 = vld [vmem:[%s2 + $0x40] sm:$0xff]
  %v138 = vld [vmem:[%s2 + $0x48] sm:$0xff]
  %v139 = vld [vmem:[%s2 + $0x50] sm:$0xff]
  %v140 = vld [vmem:[%s2 + $0x58] sm:$0xff]
  %v141 = vld [vmem:[%s2 + $0x60] sm:$0xff]
  %v142 = vld [vmem:[%s2 + $0x68] sm:$0xff]
  %v143 = vld [vmem:[%s2 + $0x70] sm:$0xff]
  %v144 = vld [vmem:[%s2 + $0x78] sm:$0xff]
  %v145 = vld [vmem:[%s2 + $0x80] sm:$0xff]
  %v146 = vld [vmem:[%s2 + $0x88] sm:$0xff]
  %v147 = vld [vmem:[%s2 + $0x90] sm:$0xff]
  %v148 = vld [vmem:[%s2 + $0x98] sm:$0xff]
  %v149 = vld [vmem:[%s2 + $0xa0] sm:$0xff]
  %v150 = vld [vmem:[%s2 + $0xa8] sm:$0xff]
  %v151 = vld [vmem:[%s2 + $0xb0] sm:$0xff]
  %v152 = vld [vmem:[%s2 + $0xb8] sm:$0xff]
  %v153 = vld [vmem:[%s2 + $0xc0] sm:$0xff]
  %v154 = vld [vmem:[%s2 + $0xc8] sm:$0xff]
  %v155 = vld [vmem:[%s2 + $0xd0] sm:$0xff]
  %v156 = vld [vmem:[%s2 + $0xd8] sm:$0xff]
  %v157 = vld [vmem:[%s2 + $0xe0] sm:$0xff]
  %v158 = vld [vmem:[%s2 + $0xe8] sm:$0xff]
  %v159 = vld [vmem:[%s2 + $0xf0] sm:$0xff]
  %v160 = vld [vmem:[%s2 + $0xf8] sm:$0xff]
  %v161 = vperm.slane %v37, 1
  %vm162 = vcmp.eq.s32.totalorder %v41, %v161
  %vm163 = vcmp.eq.s32.totalorder %v42, %v161
  %vm164 = vcmp.eq.s32.totalorder %v43, %v161
  %vm165 = vcmp.eq.s32.totalorder %v44, %v161
  %vm166 = vcmp.eq.s32.totalorder %v45, %v161
  %vm167 = vcmp.eq.s32.totalorder %v46, %v161
  %vm168 = vcmp.eq.s32.totalorder %v47, %v161
  %vm169 = vcmp.eq.s32.totalorder %v48, %v161
  %vm170 = vcmp.eq.s32.totalorder %v49, %v161
  %vm171 = vcmp.eq.s32.totalorder %v50, %v161
  %vm172 = vcmp.eq.s32.totalorder %v51, %v161
  %vm173 = vcmp.eq.s32.totalorder %v52, %v161
  %vm174 = vcmp.eq.s32.totalorder %v53, %v161
  %vm175 = vcmp.eq.s32.totalorder %v54, %v161
  %vm176 = vcmp.eq.s32.totalorder %v55, %v161
  %vm177 = vcmp.eq.s32.totalorder %v56, %v161
  %v178 = vsel %vm162, 1, 0
  %v179 = vsel %vm163, 1, 0
  %v180 = vsel %vm164, 1, 0
  %v181 = vsel %vm165, 1, 0
  %v182 = vsel %vm166, 1, 0
  %v183 = vsel %vm167, 1, 0
  %v184 = vsel %vm168, 1, 0
  %v185 = vsel %vm169, 1, 0
  %v186 = vsel %vm170, 1, 0
  %v187 = vsel %vm171, 1, 0
  %v188 = vsel %vm172, 1, 0
  %v189 = vsel %vm173, 1, 0
  %v190 = vsel %vm174, 1, 0
  %v191 = vsel %vm175, 1, 0
  %v192 = vsel %vm176, 1, 0
  %v193 = vsel %vm177, 1, 0
  %v194 = vcvt.s32.f32 %v178
  %v195 = vcvt.s32.f32 %v179
  %v196 = vcvt.s32.f32 %v180
  %v197 = vcvt.s32.f32 %v181
  %v198 = vcvt.s32.f32 %v182
  %v199 = vcvt.s32.f32 %v183
  %v200 = vcvt.s32.f32 %v184
  %v201 = vcvt.s32.f32 %v185
  %v202 = vcvt.s32.f32 %v186
  %v203 = vcvt.s32.f32 %v187
  %v204 = vcvt.s32.f32 %v188
  %v205 = vcvt.s32.f32 %v189
  %v206 = vcvt.s32.f32 %v190
  %v207 = vcvt.s32.f32 %v191
  %v208 = vcvt.s32.f32 %v192
  %v209 = vcvt.s32.f32 %v193
  %210 = vmatpush.msra.mxu0 %v209
  %211 = vmatpush.msra.mxu0 %v208
  %212 = vmatpush.msra.mxu0 %v207
  %213 = vmatpush.msra.mxu0 %v206
  %214 = vmatpush.msra.mxu0 %v205
  %215 = vmatpush.msra.mxu0 %v204
  %216 = vmatpush.msra.mxu0 %v203
  %217 = vmatpush.msra.mxu0 %v202
  %218 = vmatpush.msra.mxu0 %v201
  %219 = vmatpush.msra.mxu0 %v200
  %220 = vmatpush.msra.mxu0 %v199
  %221 = vmatpush.msra.mxu0 %v198
  %222 = vmatpush.msra.mxu0 %v197
  %223 = vmatpush.msra.mxu0 %v196
  %224 = vmatpush.msra.mxu0 %v195
  %225 = vmatpush.msra.mxu0 %v194
  %226 = vmatmul.f32.gmra.mxu0 %v38
  %v227 = vpop.f32.mrf.mxu0
  %v228 = vadd.f32 0.0, %v227
  %229 = vmatmul.f32.gmra.mxu0 %v39
  %v230 = vpop.f32.mrf.mxu0
  %v231 = vadd.f32 0.0, %v230
  %232 = vdwg.mxu0
  %s233 = scalar_lea.vmem %s2, 256
  %v234 = vld [vmem:[%s233] sm:$0xff]
  %v235 = vld [vmem:[%s233 + $0x8] sm:$0xff]
  %v236 = vld [vmem:[%s233 + $0x10] sm:$0xff]
  %v237 = vld [vmem:[%s233 + $0x18] sm:$0xff]
  %v238 = vld [vmem:[%s233 + $0x20] sm:$0xff]
  %v239 = vld [vmem:[%s233 + $0x28] sm:$0xff]
  %v240 = vld [vmem:[%s233 + $0x30] sm:$0xff]
  %v241 = vld [vmem:[%s233 + $0x38] sm:$0xff]
  %v242 = vld [vmem:[%s233 + $0x40] sm:$0xff]
  %v243 = vld [vmem:[%s233 + $0x48] sm:$0xff]
  %v244 = vld [vmem:[%s233 + $0x50] sm:$0xff]
  %v245 = vld [vmem:[%s233 + $0x58] sm:$0xff]
  %v246 = vld [vmem:[%s233 + $0x60] sm:$0xff]
  %v247 = vld [vmem:[%s233 + $0x68] sm:$0xff]
  %v248 = vld [vmem:[%s233 + $0x70] sm:$0xff]
  %v249 = vld [vmem:[%s233 + $0x78] sm:$0xff]
  %v250 = vld [vmem:[%s233 + $0x80] sm:$0xff]
  %v251 = vld [vmem:[%s233 + $0x88] sm:$0xff]
  %v252 = vld [vmem:[%s233 + $0x90] sm:$0xff]
  %v253 = vld [vmem:[%s233 + $0x98] sm:$0xff]
  %v254 = vld [vmem:[%s233 + $0xa0] sm:$0xff]
  %v255 = vld [vmem:[%s233 + $0xa8] sm:$0xff]
  %v256 = vld [vmem:[%s233 + $0xb0] sm:$0xff]
  %v257 = vld [vmem:[%s233 + $0xb8] sm:$0xff]
  %v258 = vld [vmem:[%s233 + $0xc0] sm:$0xff]
  %v259 = vld [vmem:[%s233 + $0xc8] sm:$0xff]
  %v260 = vld [vmem:[%s233 + $0xd0] sm:$0xff]
  %v261 = vld [vmem:[%s233 + $0xd8] sm:$0xff]
  %v262 = vld [vmem:[%s233 + $0xe0] sm:$0xff]
  %v263 = vld [vmem:[%s233 + $0xe8] sm:$0xff]
  %v264 = vld [vmem:[%s233 + $0xf0] sm:$0xff]
  %v265 = vld [vmem:[%s233 + $0xf8] sm:$0xff]
  %vm266 = vcmask 130048
  %v268 = vsel %vm266, %v234, 0
  %v271 = vsel %vm266, %v235, 0
  %v274 = vsel %vm266, %v236, 0
  %v277 = vsel %vm266, %v237, 0
  %v280 = vsel %vm266, %v238, 0
  %v283 = vsel %vm266, %v239, 0
  %v286 = vsel %vm266, %v240, 0
  %v289 = vsel %vm266, %v241, 0
  %v292 = vsel %vm266, %v242, 0
  %v295 = vsel %vm266, %v243, 0
  %v298 = vsel %vm266, %v244, 0
  %v301 = vsel %vm266, %v245, 0
  %v304 = vsel %vm266, %v246, 0
  %v307 = vsel %vm266, %v247, 0
  %v310 = vsel %vm266, %v248, 0
  %v313 = vsel %vm266, %v249, 0
  %v316 = vsel %vm266, %v250, 0
  %v319 = vsel %vm266, %v251, 0
  %v322 = vsel %vm266, %v252, 0
  %v325 = vsel %vm266, %v253, 0
  %v328 = vsel %vm266, %v254, 0
  %v331 = vsel %vm266, %v255, 0
  %v334 = vsel %vm266, %v256, 0
  %v337 = vsel %vm266, %v257, 0
  %v340 = vsel %vm266, %v258, 0
  %v343 = vsel %vm266, %v259, 0
  %v346 = vsel %vm266, %v260, 0
  %v349 = vsel %vm266, %v261, 0
  %v352 = vsel %vm266, %v262, 0
  %v355 = vsel %vm266, %v263, 0
  %v358 = vsel %vm266, %v264, 0
  %v361 = vsel %vm266, %v265, 0
  %363 = vmatpush.msra.mxu0 0.0
  %364 = vmatpush.msra.mxu0 0.0
  %365 = vmatpush.msra.mxu0 0.0
  %366 = vmatpush.msra.mxu0 0.0
  %367 = vmatpush.msra.mxu0 0.0
  %368 = vmatpush.msra.mxu0 0.0
  %369 = vmatpush.msra.mxu0 0.0
  %370 = vmatpush.msra.mxu0 0.0
  %371 = vmatpush.msra.mxu0 0.0
  %372 = vmatpush.msra.mxu0 0.0
  %373 = vmatpush.msra.mxu0 0.0
  %374 = vmatpush.msra.mxu0 0.0
  %375 = vmatpush.msra.mxu0 0.0
  %376 = vmatpush.msra.mxu0 0.0
  %377 = vmatpush.msra.mxu0 %v231
  %378 = vmatpush.msra.mxu0 %v228
  %379 = vmatmul.f32.gmra.mxu0 %v268
  %v380 = vpop.f32.mrf.mxu0
  %v381 = vadd.f32 0.0, %v380
  %382 = vmatmul.f32.gmra.mxu0 %v271
  %v383 = vpop.f32.mrf.mxu0
  %v384 = vadd.f32 0.0, %v383
  %385 = vmatmul.f32.gmra.mxu0 %v274
  %v386 = vpop.f32.mrf.mxu0
  %v387 = vadd.f32 0.0, %v386
  %388 = vmatmul.f32.gmra.mxu0 %v277
  %v389 = vpop.f32.mrf.mxu0
  %v390 = vadd.f32 0.0, %v389
  %391 = vmatmul.f32.gmra.mxu0 %v280
  %v392 = vpop.f32.mrf.mxu0
  %v393 = vadd.f32 0.0, %v392
  %394 = vmatmul.f32.gmra.mxu0 %v283
  %v395 = vpop.f32.mrf.mxu0
  %v396 = vadd.f32 0.0, %v395
  %397 = vmatmul.f32.gmra.mxu0 %v286
  %v398 = vpop.f32.mrf.mxu0
  %v399 = vadd.f32 0.0, %v398
  %400 = vmatmul.f32.gmra.mxu0 %v289
  %v401 = vpop.f32.mrf.mxu0
  %v402 = vadd.f32 0.0, %v401
  %403 = vmatmul.f32.gmra.mxu0 %v292
  %v404 = vpop.f32.mrf.mxu0
  %v405 = vadd.f32 0.0, %v404
  %406 = vmatmul.f32.gmra.mxu0 %v295
  %v407 = vpop.f32.mrf.mxu0
  %v408 = vadd.f32 0.0, %v407
  %409 = vmatmul.f32.gmra.mxu0 %v298
  %v410 = vpop.f32.mrf.mxu0
  %v411 = vadd.f32 0.0, %v410
  %412 = vmatmul.f32.gmra.mxu0 %v301
  %v413 = vpop.f32.mrf.mxu0
  %v414 = vadd.f32 0.0, %v413
  %415 = vmatmul.f32.gmra.mxu0 %v304
  %v416 = vpop.f32.mrf.mxu0
  %v417 = vadd.f32 0.0, %v416
  %418 = vmatmul.f32.gmra.mxu0 %v307
  %v419 = vpop.f32.mrf.mxu0
  %v420 = vadd.f32 0.0, %v419
  %421 = vmatmul.f32.gmra.mxu0 %v310
  %v422 = vpop.f32.mrf.mxu0
  %v423 = vadd.f32 0.0, %v422
  %424 = vmatmul.f32.gmra.mxu0 %v313
  %v425 = vpop.f32.mrf.mxu0
  %v426 = vadd.f32 0.0, %v425
  %427 = vmatmul.f32.gmra.mxu0 %v316
  %v428 = vpop.f32.mrf.mxu0
  %v429 = vadd.f32 0.0, %v428
  %430 = vmatmul.f32.gmra.mxu0 %v319
  %v431 = vpop.f32.mrf.mxu0
  %v432 = vadd.f32 0.0, %v431
  %433 = vmatmul.f32.gmra.mxu0 %v322
  %v434 = vpop.f32.mrf.mxu0
  %v435 = vadd.f32 0.0, %v434
  %436 = vmatmul.f32.gmra.mxu0 %v325
  %v437 = vpop.f32.mrf.mxu0
  %v438 = vadd.f32 0.0, %v437
  %439 = vmatmul.f32.gmra.mxu0 %v328
  %v440 = vpop.f32.mrf.mxu0
  %v441 = vadd.f32 0.0, %v440
  %442 = vmatmul.f32.gmra.mxu0 %v331
  %v443 = vpop.f32.mrf.mxu0
  %v444 = vadd.f32 0.0, %v443
  %445 = vmatmul.f32.gmra.mxu0 %v334
  %v446 = vpop.f32.mrf.mxu0
  %v447 = vadd.f32 0.0, %v446
  %448 = vmatmul.f32.gmra.mxu0 %v337
  %v449 = vpop.f32.mrf.mxu0
  %v450 = vadd.f32 0.0, %v449
  %451 = vmatmul.f32.gmra.mxu0 %v340
  %v452 = vpop.f32.mrf.mxu0
  %v453 = vadd.f32 0.0, %v452
  %454 = vmatmul.f32.gmra.mxu0 %v343
  %v455 = vpop.f32.mrf.mxu0
  %v456 = vadd.f32 0.0, %v455
  %457 = vmatmul.f32.gmra.mxu0 %v346
  %v458 = vpop.f32.mrf.mxu0
  %v459 = vadd.f32 0.0, %v458
  %460 = vmatmul.f32.gmra.mxu0 %v349
  %v461 = vpop.f32.mrf.mxu0
  %v462 = vadd.f32 0.0, %v461
  %463 = vmatmul.f32.gmra.mxu0 %v352
  %v464 = vpop.f32.mrf.mxu0
  %v465 = vadd.f32 0.0, %v464
  %466 = vmatmul.f32.gmra.mxu0 %v355
  %v467 = vpop.f32.mrf.mxu0
  %v468 = vadd.f32 0.0, %v467
  %469 = vmatmul.f32.gmra.mxu0 %v358
  %v470 = vpop.f32.mrf.mxu0
  %v471 = vadd.f32 0.0, %v470
  %472 = vmatmul.f32.gmra.mxu0 %v361
  %v473 = vpop.f32.mrf.mxu0
  %v474 = vadd.f32 0.0, %v473
  %475 = vdwg.mxu0
  %v477 = vsel %vm266, %v129, 0
  %v480 = vsel %vm266, %v130, 0
  %v483 = vsel %vm266, %v131, 0
  %v486 = vsel %vm266, %v132, 0
  %v489 = vsel %vm266, %v133, 0
  %v492 = vsel %vm266, %v134, 0
  %v495 = vsel %vm266, %v135, 0
  %v498 = vsel %vm266, %v136, 0
  %v501 = vsel %vm266, %v137, 0
  %v504 = vsel %vm266, %v138, 0
  %v507 = vsel %vm266, %v139, 0
  %v510 = vsel %vm266, %v140, 0
  %v513 = vsel %vm266, %v141, 0
  %v516 = vsel %vm266, %v142, 0
  %v519 = vsel %vm266, %v143, 0
  %v522 = vsel %vm266, %v144, 0
  %v525 = vsel %vm266, %v145, 0
  %v528 = vsel %vm266, %v146, 0
  %v531 = vsel %vm266, %v147, 0
  %v534 = vsel %vm266, %v148, 0
  %v537 = vsel %vm266, %v149, 0
  %v540 = vsel %vm266, %v150, 0
  %v543 = vsel %vm266, %v151, 0
  %v546 = vsel %vm266, %v152, 0
  %v549 = vsel %vm266, %v153, 0
  %v552 = vsel %vm266, %v154, 0
  %v555 = vsel %vm266, %v155, 0
  %v558 = vsel %vm266, %v156, 0
  %v561 = vsel %vm266, %v157, 0
  %v564 = vsel %vm266, %v158, 0
  %v567 = vsel %vm266, %v159, 0
  %v570 = vsel %vm266, %v160, 0
  %572 = vmatpush.msra.mxu0 0.0
  %573 = vmatpush.msra.mxu0 0.0
  %574 = vmatpush.msra.mxu0 0.0
  %575 = vmatpush.msra.mxu0 0.0
  %576 = vmatpush.msra.mxu0 0.0
  %577 = vmatpush.msra.mxu0 0.0
  %578 = vmatpush.msra.mxu0 0.0
  %579 = vmatpush.msra.mxu0 0.0
  %580 = vmatpush.msra.mxu0 0.0
  %581 = vmatpush.msra.mxu0 0.0
  %582 = vmatpush.msra.mxu0 0.0
  %583 = vmatpush.msra.mxu0 0.0
  %584 = vmatpush.msra.mxu0 0.0
  %585 = vmatpush.msra.mxu0 0.0
  %586 = vmatpush.msra.mxu0 %v127
  %587 = vmatpush.msra.mxu0 %v124
  %588 = vmatmul.f32.gmra.mxu0 %v477
  %v589 = vpop.f32.mrf.mxu0
  %v590 = vadd.f32 %v381, %v589
  %591 = vmatmul.f32.gmra.mxu0 %v480
  %v592 = vpop.f32.mrf.mxu0
  %v593 = vadd.f32 %v384, %v592
  %594 = vmatmul.f32.gmra.mxu0 %v483
  %v595 = vpop.f32.mrf.mxu0
  %v596 = vadd.f32 %v387, %v595
  %597 = vmatmul.f32.gmra.mxu0 %v486
  %v598 = vpop.f32.mrf.mxu0
  %v599 = vadd.f32 %v390, %v598
  %600 = vmatmul.f32.gmra.mxu0 %v489
  %v601 = vpop.f32.mrf.mxu0
  %v602 = vadd.f32 %v393, %v601
  %603 = vmatmul.f32.gmra.mxu0 %v492
  %v604 = vpop.f32.mrf.mxu0
  %v605 = vadd.f32 %v396, %v604
  %606 = vmatmul.f32.gmra.mxu0 %v495
  %v607 = vpop.f32.mrf.mxu0
  %v608 = vadd.f32 %v399, %v607
  %609 = vmatmul.f32.gmra.mxu0 %v498
  %v610 = vpop.f32.mrf.mxu0
  %v611 = vadd.f32 %v402, %v610
  %612 = vmatmul.f32.gmra.mxu0 %v501
  %v613 = vpop.f32.mrf.mxu0
  %v614 = vadd.f32 %v405, %v613
  %615 = vmatmul.f32.gmra.mxu0 %v504
  %v616 = vpop.f32.mrf.mxu0
  %v617 = vadd.f32 %v408, %v616
  %618 = vmatmul.f32.gmra.mxu0 %v507
  %v619 = vpop.f32.mrf.mxu0
  %v620 = vadd.f32 %v411, %v619
  %621 = vmatmul.f32.gmra.mxu0 %v510
  %v622 = vpop.f32.mrf.mxu0
  %v623 = vadd.f32 %v414, %v622
  %624 = vmatmul.f32.gmra.mxu0 %v513
  %v625 = vpop.f32.mrf.mxu0
  %v626 = vadd.f32 %v417, %v625
  %627 = vmatmul.f32.gmra.mxu0 %v516
  %v628 = vpop.f32.mrf.mxu0
  %v629 = vadd.f32 %v420, %v628
  %630 = vmatmul.f32.gmra.mxu0 %v519
  %v631 = vpop.f32.mrf.mxu0
  %v632 = vadd.f32 %v423, %v631
  %633 = vmatmul.f32.gmra.mxu0 %v522
  %v634 = vpop.f32.mrf.mxu0
  %v635 = vadd.f32 %v426, %v634
  %636 = vmatmul.f32.gmra.mxu0 %v525
  %v637 = vpop.f32.mrf.mxu0
  %v638 = vadd.f32 %v429, %v637
  %639 = vmatmul.f32.gmra.mxu0 %v528
  %v640 = vpop.f32.mrf.mxu0
  %v641 = vadd.f32 %v432, %v640
  %642 = vmatmul.f32.gmra.mxu0 %v531
  %v643 = vpop.f32.mrf.mxu0
  %v644 = vadd.f32 %v435, %v643
  %645 = vmatmul.f32.gmra.mxu0 %v534
  %v646 = vpop.f32.mrf.mxu0
  %v647 = vadd.f32 %v438, %v646
  %648 = vmatmul.f32.gmra.mxu0 %v537
  %v649 = vpop.f32.mrf.mxu0
  %v650 = vadd.f32 %v441, %v649
  %651 = vmatmul.f32.gmra.mxu0 %v540
  %v652 = vpop.f32.mrf.mxu0
  %v653 = vadd.f32 %v444, %v652
  %654 = vmatmul.f32.gmra.mxu0 %v543
  %v655 = vpop.f32.mrf.mxu0
  %v656 = vadd.f32 %v447, %v655
  %657 = vmatmul.f32.gmra.mxu0 %v546
  %v658 = vpop.f32.mrf.mxu0
  %v659 = vadd.f32 %v450, %v658
  %660 = vmatmul.f32.gmra.mxu0 %v549
  %v661 = vpop.f32.mrf.mxu0
  %v662 = vadd.f32 %v453, %v661
  %663 = vmatmul.f32.gmra.mxu0 %v552
  %v664 = vpop.f32.mrf.mxu0
  %v665 = vadd.f32 %v456, %v664
  %666 = vmatmul.f32.gmra.mxu0 %v555
  %v667 = vpop.f32.mrf.mxu0
  %v668 = vadd.f32 %v459, %v667
  %669 = vmatmul.f32.gmra.mxu0 %v558
  %v670 = vpop.f32.mrf.mxu0
  %v671 = vadd.f32 %v462, %v670
  %672 = vmatmul.f32.gmra.mxu0 %v561
  %v673 = vpop.f32.mrf.mxu0
  %v674 = vadd.f32 %v465, %v673
  %675 = vmatmul.f32.gmra.mxu0 %v564
  %v676 = vpop.f32.mrf.mxu0
  %v677 = vadd.f32 %v468, %v676
  %678 = vmatmul.f32.gmra.mxu0 %v567
  %v679 = vpop.f32.mrf.mxu0
  %v680 = vadd.f32 %v471, %v679
  %681 = vmatmul.f32.gmra.mxu0 %v570
  %v682 = vpop.f32.mrf.mxu0
  %v683 = vadd.f32 %v474, %v682
  %684 = vdwg.mxu0
  %v685 = vperm.slane %v37, 2
  %vm686 = vcmp.eq.s32.totalorder %v41, %v685
  %vm687 = vcmp.eq.s32.totalorder %v42, %v685
  %vm688 = vcmp.eq.s32.totalorder %v43, %v685
  %vm689 = vcmp.eq.s32.totalorder %v44, %v685
  %vm690 = vcmp.eq.s32.totalorder %v45, %v685
  %vm691 = vcmp.eq.s32.totalorder %v46, %v685
  %vm692 = vcmp.eq.s32.totalorder %v47, %v685
  %vm693 = vcmp.eq.s32.totalorder %v48, %v685
  %vm694 = vcmp.eq.s32.totalorder %v49, %v685
  %vm695 = vcmp.eq.s32.totalorder %v50, %v685
  %vm696 = vcmp.eq.s32.totalorder %v51, %v685
  %vm697 = vcmp.eq.s32.totalorder %v52, %v685
  %vm698 = vcmp.eq.s32.totalorder %v53, %v685
  %vm699 = vcmp.eq.s32.totalorder %v54, %v685
  %vm700 = vcmp.eq.s32.totalorder %v55, %v685
  %vm701 = vcmp.eq.s32.totalorder %v56, %v685
  %v702 = vsel %vm686, 1, 0
  %v703 = vsel %vm687, 1, 0
  %v704 = vsel %vm688, 1, 0
  %v705 = vsel %vm689, 1, 0
  %v706 = vsel %vm690, 1, 0
  %v707 = vsel %vm691, 1, 0
  %v708 = vsel %vm692, 1, 0
  %v709 = vsel %vm693, 1, 0
  %v710 = vsel %vm694, 1, 0
  %v711 = vsel %vm695, 1, 0
  %v712 = vsel %vm696, 1, 0
  %v713 = vsel %vm697, 1, 0
  %v714 = vsel %vm698, 1, 0
  %v715 = vsel %vm699, 1, 0
  %v716 = vsel %vm700, 1, 0
  %v717 = vsel %vm701, 1, 0
  %v718 = vcvt.s32.f32 %v702
  %v719 = vcvt.s32.f32 %v703
  %v720 = vcvt.s32.f32 %v704
  %v721 = vcvt.s32.f32 %v705
  %v722 = vcvt.s32.f32 %v706
  %v723 = vcvt.s32.f32 %v707
  %v724 = vcvt.s32.f32 %v708
  %v725 = vcvt.s32.f32 %v709
  %v726 = vcvt.s32.f32 %v710
  %v727 = vcvt.s32.f32 %v711
  %v728 = vcvt.s32.f32 %v712
  %v729 = vcvt.s32.f32 %v713
  %v730 = vcvt.s32.f32 %v714
  %v731 = vcvt.s32.f32 %v715
  %v732 = vcvt.s32.f32 %v716
  %v733 = vcvt.s32.f32 %v717
  %734 = vmatpush.msra.mxu0 %v733
  %735 = vmatpush.msra.mxu0 %v732
  %736 = vmatpush.msra.mxu0 %v731
  %737 = vmatpush.msra.mxu0 %v730
  %738 = vmatpush.msra.mxu0 %v729
  %739 = vmatpush.msra.mxu0 %v728
  %740 = vmatpush.msra.mxu0 %v727
  %741 = vmatpush.msra.mxu0 %v726
  %742 = vmatpush.msra.mxu0 %v725
  %743 = vmatpush.msra.mxu0 %v724
  %744 = vmatpush.msra.mxu0 %v723
  %745 = vmatpush.msra.mxu0 %v722
  %746 = vmatpush.msra.mxu0 %v721
  %747 = vmatpush.msra.mxu0 %v720
  %748 = vmatpush.msra.mxu0 %v719
  %749 = vmatpush.msra.mxu0 %v718
  %750 = vmatmul.f32.gmra.mxu0 %v38
  %v751 = vpop.f32.mrf.mxu0
  %v752 = vadd.f32 0.0, %v751
  %753 = vmatmul.f32.gmra.mxu0 %v39
  %v754 = vpop.f32.mrf.mxu0
  %v755 = vadd.f32 0.0, %v754
  %756 = vdwg.mxu0
  %s757 = scalar_lea.vmem %s2, 512
  %v758 = vld [vmem:[%s757] sm:$0xff]
  %v759 = vld [vmem:[%s757 + $0x8] sm:$0xff]
  %v760 = vld [vmem:[%s757 + $0x10] sm:$0xff]
  %v761 = vld [vmem:[%s757 + $0x18] sm:$0xff]
  %v762 = vld [vmem:[%s757 + $0x20] sm:$0xff]
  %v763 = vld [vmem:[%s757 + $0x28] sm:$0xff]
  %v764 = vld [vmem:[%s757 + $0x30] sm:$0xff]
  %v765 = vld [vmem:[%s757 + $0x38] sm:$0xff]
  %v766 = vld [vmem:[%s757 + $0x40] sm:$0xff]
  %v767 = vld [vmem:[%s757 + $0x48] sm:$0xff]
  %v768 = vld [vmem:[%s757 + $0x50] sm:$0xff]
  %v769 = vld [vmem:[%s757 + $0x58] sm:$0xff]
  %v770 = vld [vmem:[%s757 + $0x60] sm:$0xff]
  %v771 = vld [vmem:[%s757 + $0x68] sm:$0xff]
  %v772 = vld [vmem:[%s757 + $0x70] sm:$0xff]
  %v773 = vld [vmem:[%s757 + $0x78] sm:$0xff]
  %v774 = vld [vmem:[%s757 + $0x80] sm:$0xff]
  %v775 = vld [vmem:[%s757 + $0x88] sm:$0xff]
  %v776 = vld [vmem:[%s757 + $0x90] sm:$0xff]
  %v777 = vld [vmem:[%s757 + $0x98] sm:$0xff]
  %v778 = vld [vmem:[%s757 + $0xa0] sm:$0xff]
  %v779 = vld [vmem:[%s757 + $0xa8] sm:$0xff]
  %v780 = vld [vmem:[%s757 + $0xb0] sm:$0xff]
  %v781 = vld [vmem:[%s757 + $0xb8] sm:$0xff]
  %v782 = vld [vmem:[%s757 + $0xc0] sm:$0xff]
  %v783 = vld [vmem:[%s757 + $0xc8] sm:$0xff]
  %v784 = vld [vmem:[%s757 + $0xd0] sm:$0xff]
  %v785 = vld [vmem:[%s757 + $0xd8] sm:$0xff]
  %v786 = vld [vmem:[%s757 + $0xe0] sm:$0xff]
  %v787 = vld [vmem:[%s757 + $0xe8] sm:$0xff]
  %v788 = vld [vmem:[%s757 + $0xf0] sm:$0xff]
  %v789 = vld [vmem:[%s757 + $0xf8] sm:$0xff]
  %v791 = vsel %vm266, %v758, 0
  %v794 = vsel %vm266, %v759, 0
  %v797 = vsel %vm266, %v760, 0
  %v800 = vsel %vm266, %v761, 0
  %v803 = vsel %vm266, %v762, 0
  %v806 = vsel %vm266, %v763, 0
  %v809 = vsel %vm266, %v764, 0
  %v812 = vsel %vm266, %v765, 0
  %v815 = vsel %vm266, %v766, 0
  %v818 = vsel %vm266, %v767, 0
  %v821 = vsel %vm266, %v768, 0
  %v824 = vsel %vm266, %v769, 0
  %v827 = vsel %vm266, %v770, 0
  %v830 = vsel %vm266, %v771, 0
  %v833 = vsel %vm266, %v772, 0
  %v836 = vsel %vm266, %v773, 0
  %v839 = vsel %vm266, %v774, 0
  %v842 = vsel %vm266, %v775, 0
  %v845 = vsel %vm266, %v776, 0
  %v848 = vsel %vm266, %v777, 0
  %v851 = vsel %vm266, %v778, 0
  %v854 = vsel %vm266, %v779, 0
  %v857 = vsel %vm266, %v780, 0
  %v860 = vsel %vm266, %v781, 0
  %v863 = vsel %vm266, %v782, 0
  %v866 = vsel %vm266, %v783, 0
  %v869 = vsel %vm266, %v784, 0
  %v872 = vsel %vm266, %v785, 0
  %v875 = vsel %vm266, %v786, 0
  %v878 = vsel %vm266, %v787, 0
  %v881 = vsel %vm266, %v788, 0
  %v884 = vsel %vm266, %v789, 0
  %886 = vmatpush.msra.mxu0 0.0
  %887 = vmatpush.msra.mxu0 0.0
  %888 = vmatpush.msra.mxu0 0.0
  %889 = vmatpush.msra.mxu0 0.0
  %890 = vmatpush.msra.mxu0 0.0
  %891 = vmatpush.msra.mxu0 0.0
  %892 = vmatpush.msra.mxu0 0.0
  %893 = vmatpush.msra.mxu0 0.0
  %894 = vmatpush.msra.mxu0 0.0
  %895 = vmatpush.msra.mxu0 0.0
  %896 = vmatpush.msra.mxu0 0.0
  %897 = vmatpush.msra.mxu0 0.0
  %898 = vmatpush.msra.mxu0 0.0
  %899 = vmatpush.msra.mxu0 0.0
  %900 = vmatpush.msra.mxu0 %v755
  %901 = vmatpush.msra.mxu0 %v752
  %902 = vmatmul.f32.gmra.mxu0 %v791
  %v903 = vpop.f32.mrf.mxu0
  %v904 = vadd.f32 0.0, %v903
  %905 = vmatmul.f32.gmra.mxu0 %v794
  %v906 = vpop.f32.mrf.mxu0
  %v907 = vadd.f32 0.0, %v906
  %908 = vmatmul.f32.gmra.mxu0 %v797
  %v909 = vpop.f32.mrf.mxu0
  %v910 = vadd.f32 0.0, %v909
  %911 = vmatmul.f32.gmra.mxu0 %v800
  %v912 = vpop.f32.mrf.mxu0
  %v913 = vadd.f32 0.0, %v912
  %914 = vmatmul.f32.gmra.mxu0 %v803
  %v915 = vpop.f32.mrf.mxu0
  %v916 = vadd.f32 0.0, %v915
  %917 = vmatmul.f32.gmra.mxu0 %v806
  %v918 = vpop.f32.mrf.mxu0
  %v919 = vadd.f32 0.0, %v918
  %920 = vmatmul.f32.gmra.mxu0 %v809
  %v921 = vpop.f32.mrf.mxu0
  %v922 = vadd.f32 0.0, %v921
  %923 = vmatmul.f32.gmra.mxu0 %v812
  %v924 = vpop.f32.mrf.mxu0
  %v925 = vadd.f32 0.0, %v924
  %926 = vmatmul.f32.gmra.mxu0 %v815
  %v927 = vpop.f32.mrf.mxu0
  %v928 = vadd.f32 0.0, %v927
  %929 = vmatmul.f32.gmra.mxu0 %v818
  %v930 = vpop.f32.mrf.mxu0
  %v931 = vadd.f32 0.0, %v930
  %932 = vmatmul.f32.gmra.mxu0 %v821
  %v933 = vpop.f32.mrf.mxu0
  %v934 = vadd.f32 0.0, %v933
  %935 = vmatmul.f32.gmra.mxu0 %v824
  %v936 = vpop.f32.mrf.mxu0
  %v937 = vadd.f32 0.0, %v936
  %938 = vmatmul.f32.gmra.mxu0 %v827
  %v939 = vpop.f32.mrf.mxu0
  %v940 = vadd.f32 0.0, %v939
  %941 = vmatmul.f32.gmra.mxu0 %v830
  %v942 = vpop.f32.mrf.mxu0
  %v943 = vadd.f32 0.0, %v942
  %944 = vmatmul.f32.gmra.mxu0 %v833
  %v945 = vpop.f32.mrf.mxu0
  %v946 = vadd.f32 0.0, %v945
  %947 = vmatmul.f32.gmra.mxu0 %v836
  %v948 = vpop.f32.mrf.mxu0
  %v949 = vadd.f32 0.0, %v948
  %950 = vmatmul.f32.gmra.mxu0 %v839
  %v951 = vpop.f32.mrf.mxu0
  %v952 = vadd.f32 0.0, %v951
  %953 = vmatmul.f32.gmra.mxu0 %v842
  %v954 = vpop.f32.mrf.mxu0
  %v955 = vadd.f32 0.0, %v954
  %956 = vmatmul.f32.gmra.mxu0 %v845
  %v957 = vpop.f32.mrf.mxu0
  %v958 = vadd.f32 0.0, %v957
  %959 = vmatmul.f32.gmra.mxu0 %v848
  %v960 = vpop.f32.mrf.mxu0
  %v961 = vadd.f32 0.0, %v960
  %962 = vmatmul.f32.gmra.mxu0 %v851
  %v963 = vpop.f32.mrf.mxu0
  %v964 = vadd.f32 0.0, %v963
  %965 = vmatmul.f32.gmra.mxu0 %v854
  %v966 = vpop.f32.mrf.mxu0
  %v967 = vadd.f32 0.0, %v966
  %968 = vmatmul.f32.gmra.mxu0 %v857
  %v969 = vpop.f32.mrf.mxu0
  %v970 = vadd.f32 0.0, %v969
  %971 = vmatmul.f32.gmra.mxu0 %v860
  %v972 = vpop.f32.mrf.mxu0
  %v973 = vadd.f32 0.0, %v972
  %974 = vmatmul.f32.gmra.mxu0 %v863
  %v975 = vpop.f32.mrf.mxu0
  %v976 = vadd.f32 0.0, %v975
  %977 = vmatmul.f32.gmra.mxu0 %v866
  %v978 = vpop.f32.mrf.mxu0
  %v979 = vadd.f32 0.0, %v978
  %980 = vmatmul.f32.gmra.mxu0 %v869
  %v981 = vpop.f32.mrf.mxu0
  %v982 = vadd.f32 0.0, %v981
  %983 = vmatmul.f32.gmra.mxu0 %v872
  %v984 = vpop.f32.mrf.mxu0
  %v985 = vadd.f32 0.0, %v984
  %986 = vmatmul.f32.gmra.mxu0 %v875
  %v987 = vpop.f32.mrf.mxu0
  %v988 = vadd.f32 0.0, %v987
  %989 = vmatmul.f32.gmra.mxu0 %v878
  %v990 = vpop.f32.mrf.mxu0
  %v991 = vadd.f32 0.0, %v990
  %992 = vmatmul.f32.gmra.mxu0 %v881
  %v993 = vpop.f32.mrf.mxu0
  %v994 = vadd.f32 0.0, %v993
  %995 = vmatmul.f32.gmra.mxu0 %v884
  %v996 = vpop.f32.mrf.mxu0
  %v997 = vadd.f32 0.0, %v996
  %998 = vdwg.mxu0
  %v999 = vadd.f32 %v590, %v904
  %v1000 = vadd.f32 %v593, %v907
  %v1001 = vadd.f32 %v596, %v910
  %v1002 = vadd.f32 %v599, %v913
  %v1003 = vadd.f32 %v602, %v916
  %v1004 = vadd.f32 %v605, %v919
  %v1005 = vadd.f32 %v608, %v922
  %v1006 = vadd.f32 %v611, %v925
  %v1007 = vadd.f32 %v614, %v928
  %v1008 = vadd.f32 %v617, %v931
  %v1009 = vadd.f32 %v620, %v934
  %v1010 = vadd.f32 %v623, %v937
  %v1011 = vadd.f32 %v626, %v940
  %v1012 = vadd.f32 %v629, %v943
  %v1013 = vadd.f32 %v632, %v946
  %v1014 = vadd.f32 %v635, %v949
  %v1015 = vadd.f32 %v638, %v952
  %v1016 = vadd.f32 %v641, %v955
  %v1017 = vadd.f32 %v644, %v958
  %v1018 = vadd.f32 %v647, %v961
  %v1019 = vadd.f32 %v650, %v964
  %v1020 = vadd.f32 %v653, %v967
  %v1021 = vadd.f32 %v656, %v970
  %v1022 = vadd.f32 %v659, %v973
  %v1023 = vadd.f32 %v662, %v976
  %v1024 = vadd.f32 %v665, %v979
  %v1025 = vadd.f32 %v668, %v982
  %v1026 = vadd.f32 %v671, %v985
  %v1027 = vadd.f32 %v674, %v988
  %v1028 = vadd.f32 %v677, %v991
  %v1029 = vadd.f32 %v680, %v994
  %v1030 = vadd.f32 %v683, %v997
  %v1031 = vperm.slane %v37, 3
  %vm1032 = vcmp.eq.s32.totalorder %v41, %v1031
  %vm1033 = vcmp.eq.s32.totalorder %v42, %v1031
  %vm1034 = vcmp.eq.s32.totalorder %v43, %v1031
  %vm1035 = vcmp.eq.s32.totalorder %v44, %v1031
  %vm1036 = vcmp.eq.s32.totalorder %v45, %v1031
  %vm1037 = vcmp.eq.s32.totalorder %v46, %v1031
  %vm1038 = vcmp.eq.s32.totalorder %v47, %v1031
  %vm1039 = vcmp.eq.s32.totalorder %v48, %v1031
  %vm1040 = vcmp.eq.s32.totalorder %v49, %v1031
  %vm1041 = vcmp.eq.s32.totalorder %v50, %v1031
  %vm1042 = vcmp.eq.s32.totalorder %v51, %v1031
  %vm1043 = vcmp.eq.s32.totalorder %v52, %v1031
  %vm1044 = vcmp.eq.s32.totalorder %v53, %v1031
  %vm1045 = vcmp.eq.s32.totalorder %v54, %v1031
  %vm1046 = vcmp.eq.s32.totalorder %v55, %v1031
  %vm1047 = vcmp.eq.s32.totalorder %v56, %v1031
  %v1048 = vsel %vm1032, 1, 0
  %v1049 = vsel %vm1033, 1, 0
  %v1050 = vsel %vm1034, 1, 0
  %v1051 = vsel %vm1035, 1, 0
  %v1052 = vsel %vm1036, 1, 0
  %v1053 = vsel %vm1037, 1, 0
  %v1054 = vsel %vm1038, 1, 0
  %v1055 = vsel %vm1039, 1, 0
  %v1056 = vsel %vm1040, 1, 0
  %v1057 = vsel %vm1041, 1, 0
  %v1058 = vsel %vm1042, 1, 0
  %v1059 = vsel %vm1043, 1, 0
  %v1060 = vsel %vm1044, 1, 0
  %v1061 = vsel %vm1045, 1, 0
  %v1062 = vsel %vm1046, 1, 0
  %v1063 = vsel %vm1047, 1, 0
  %v1064 = vcvt.s32.f32 %v1048
  %v1065 = vcvt.s32.f32 %v1049
  %v1066 = vcvt.s32.f32 %v1050
  %v1067 = vcvt.s32.f32 %v1051
  %v1068 = vcvt.s32.f32 %v1052
  %v1069 = vcvt.s32.f32 %v1053
  %v1070 = vcvt.s32.f32 %v1054
  %v1071 = vcvt.s32.f32 %v1055
  %v1072 = vcvt.s32.f32 %v1056
  %v1073 = vcvt.s32.f32 %v1057
  %v1074 = vcvt.s32.f32 %v1058
  %v1075 = vcvt.s32.f32 %v1059
  %v1076 = vcvt.s32.f32 %v1060
  %v1077 = vcvt.s32.f32 %v1061
  %v1078 = vcvt.s32.f32 %v1062
  %v1079 = vcvt.s32.f32 %v1063
  %1080 = vmatpush.msra.mxu0 %v1079
  %1081 = vmatpush.msra.mxu0 %v1078
  %1082 = vmatpush.msra.mxu0 %v1077
  %1083 = vmatpush.msra.mxu0 %v1076
  %1084 = vmatpush.msra.mxu0 %v1075
  %1085 = vmatpush.msra.mxu0 %v1074
  %1086 = vmatpush.msra.mxu0 %v1073
  %1087 = vmatpush.msra.mxu0 %v1072
  %1088 = vmatpush.msra.mxu0 %v1071
  %1089 = vmatpush.msra.mxu0 %v1070
  %1090 = vmatpush.msra.mxu0 %v1069
  %1091 = vmatpush.msra.mxu0 %v1068
  %1092 = vmatpush.msra.mxu0 %v1067
  %1093 = vmatpush.msra.mxu0 %v1066
  %1094 = vmatpush.msra.mxu0 %v1065
  %1095 = vmatpush.msra.mxu0 %v1064
  %1096 = vmatmul.f32.gmra.mxu0 %v38
  %v1097 = vpop.f32.mrf.mxu0
  %v1098 = vadd.f32 0.0, %v1097
  %1099 = vmatmul.f32.gmra.mxu0 %v39
  %v1100 = vpop.f32.mrf.mxu0
  %v1101 = vadd.f32 0.0, %v1100
  %1102 = vdwg.mxu0
  %s1103 = scalar_lea.vmem %s2, 768
  %v1104 = vld [vmem:[%s1103] sm:$0xff]
  %v1105 = vld [vmem:[%s1103 + $0x8] sm:$0xff]
  %v1106 = vld [vmem:[%s1103 + $0x10] sm:$0xff]
  %v1107 = vld [vmem:[%s1103 + $0x18] sm:$0xff]
  %v1108 = vld [vmem:[%s1103 + $0x20] sm:$0xff]
  %v1109 = vld [vmem:[%s1103 + $0x28] sm:$0xff]
  %v1110 = vld [vmem:[%s1103 + $0x30] sm:$0xff]
  %v1111 = vld [vmem:[%s1103 + $0x38] sm:$0xff]
  %v1112 = vld [vmem:[%s1103 + $0x40] sm:$0xff]
  %v1113 = vld [vmem:[%s1103 + $0x48] sm:$0xff]
  %v1114 = vld [vmem:[%s1103 + $0x50] sm:$0xff]
  %v1115 = vld [vmem:[%s1103 + $0x58] sm:$0xff]
  %v1116 = vld [vmem:[%s1103 + $0x60] sm:$0xff]
  %v1117 = vld [vmem:[%s1103 + $0x68] sm:$0xff]
  %v1118 = vld [vmem:[%s1103 + $0x70] sm:$0xff]
  %v1119 = vld [vmem:[%s1103 + $0x78] sm:$0xff]
  %v1120 = vld [vmem:[%s1103 + $0x80] sm:$0xff]
  %v1121 = vld [vmem:[%s1103 + $0x88] sm:$0xff]
  %v1122 = vld [vmem:[%s1103 + $0x90] sm:$0xff]
  %v1123 = vld [vmem:[%s1103 + $0x98] sm:$0xff]
  %v1124 = vld [vmem:[%s1103 + $0xa0] sm:$0xff]
  %v1125 = vld [vmem:[%s1103 + $0xa8] sm:$0xff]
  %v1126 = vld [vmem:[%s1103 + $0xb0] sm:$0xff]
  %v1127 = vld [vmem:[%s1103 + $0xb8] sm:$0xff]
  %v1128 = vld [vmem:[%s1103 + $0xc0] sm:$0xff]
  %v1129 = vld [vmem:[%s1103 + $0xc8] sm:$0xff]
  %v1130 = vld [vmem:[%s1103 + $0xd0] sm:$0xff]
  %v1131 = vld [vmem:[%s1103 + $0xd8] sm:$0xff]
  %v1132 = vld [vmem:[%s1103 + $0xe0] sm:$0xff]
  %v1133 = vld [vmem:[%s1103 + $0xe8] sm:$0xff]
  %v1134 = vld [vmem:[%s1103 + $0xf0] sm:$0xff]
  %v1135 = vld [vmem:[%s1103 + $0xf8] sm:$0xff]
  %v1137 = vsel %vm266, %v1104, 0
  %v1140 = vsel %vm266, %v1105, 0
  %v1143 = vsel %vm266, %v1106, 0
  %v1146 = vsel %vm266, %v1107, 0
  %v1149 = vsel %vm266, %v1108, 0
  %v1152 = vsel %vm266, %v1109, 0
  %v1155 = vsel %vm266, %v1110, 0
  %v1158 = vsel %vm266, %v1111, 0
  %v1161 = vsel %vm266, %v1112, 0
  %v1164 = vsel %vm266, %v1113, 0
  %v1167 = vsel %vm266, %v1114, 0
  %v1170 = vsel %vm266, %v1115, 0
  %v1173 = vsel %vm266, %v1116, 0
  %v1176 = vsel %vm266, %v1117, 0
  %v1179 = vsel %vm266, %v1118, 0
  %v1182 = vsel %vm266, %v1119, 0
  %v1185 = vsel %vm266, %v1120, 0
  %v1188 = vsel %vm266, %v1121, 0
  %v1191 = vsel %vm266, %v1122, 0
  %v1194 = vsel %vm266, %v1123, 0
  %v1197 = vsel %vm266, %v1124, 0
  %v1200 = vsel %vm266, %v1125, 0
  %v1203 = vsel %vm266, %v1126, 0
  %v1206 = vsel %vm266, %v1127, 0
  %v1209 = vsel %vm266, %v1128, 0
  %v1212 = vsel %vm266, %v1129, 0
  %v1215 = vsel %vm266, %v1130, 0
  %v1218 = vsel %vm266, %v1131, 0
  %v1221 = vsel %vm266, %v1132, 0
  %v1224 = vsel %vm266, %v1133, 0
  %v1227 = vsel %vm266, %v1134, 0
  %v1230 = vsel %vm266, %v1135, 0
  %1232 = vmatpush.msra.mxu0 0.0
  %1233 = vmatpush.msra.mxu0 0.0
  %1234 = vmatpush.msra.mxu0 0.0
  %1235 = vmatpush.msra.mxu0 0.0
  %1236 = vmatpush.msra.mxu0 0.0
  %1237 = vmatpush.msra.mxu0 0.0
  %1238 = vmatpush.msra.mxu0 0.0
  %1239 = vmatpush.msra.mxu0 0.0
  %1240 = vmatpush.msra.mxu0 0.0
  %1241 = vmatpush.msra.mxu0 0.0
  %1242 = vmatpush.msra.mxu0 0.0
  %1243 = vmatpush.msra.mxu0 0.0
  %1244 = vmatpush.msra.mxu0 0.0
  %1245 = vmatpush.msra.mxu0 0.0
  %1246 = vmatpush.msra.mxu0 %v1101
  %1247 = vmatpush.msra.mxu0 %v1098
  %1248 = vmatmul.f32.gmra.mxu0 %v1137
  %v1249 = vpop.f32.mrf.mxu0
  %v1250 = vadd.f32 0.0, %v1249
  %1251 = vmatmul.f32.gmra.mxu0 %v1140
  %v1252 = vpop.f32.mrf.mxu0
  %v1253 = vadd.f32 0.0, %v1252
  %1254 = vmatmul.f32.gmra.mxu0 %v1143
  %v1255 = vpop.f32.mrf.mxu0
  %v1256 = vadd.f32 0.0, %v1255
  %1257 = vmatmul.f32.gmra.mxu0 %v1146
  %v1258 = vpop.f32.mrf.mxu0
  %v1259 = vadd.f32 0.0, %v1258
  %1260 = vmatmul.f32.gmra.mxu0 %v1149
  %v1261 = vpop.f32.mrf.mxu0
  %v1262 = vadd.f32 0.0, %v1261
  %1263 = vmatmul.f32.gmra.mxu0 %v1152
  %v1264 = vpop.f32.mrf.mxu0
  %v1265 = vadd.f32 0.0, %v1264
  %1266 = vmatmul.f32.gmra.mxu0 %v1155
  %v1267 = vpop.f32.mrf.mxu0
  %v1268 = vadd.f32 0.0, %v1267
  %1269 = vmatmul.f32.gmra.mxu0 %v1158
  %v1270 = vpop.f32.mrf.mxu0
  %v1271 = vadd.f32 0.0, %v1270
  %1272 = vmatmul.f32.gmra.mxu0 %v1161
  %v1273 = vpop.f32.mrf.mxu0
  %v1274 = vadd.f32 0.0, %v1273
  %1275 = vmatmul.f32.gmra.mxu0 %v1164
  %v1276 = vpop.f32.mrf.mxu0
  %v1277 = vadd.f32 0.0, %v1276
  %1278 = vmatmul.f32.gmra.mxu0 %v1167
  %v1279 = vpop.f32.mrf.mxu0
  %v1280 = vadd.f32 0.0, %v1279
  %1281 = vmatmul.f32.gmra.mxu0 %v1170
  %v1282 = vpop.f32.mrf.mxu0
  %v1283 = vadd.f32 0.0, %v1282
  %1284 = vmatmul.f32.gmra.mxu0 %v1173
  %v1285 = vpop.f32.mrf.mxu0
  %v1286 = vadd.f32 0.0, %v1285
  %1287 = vmatmul.f32.gmra.mxu0 %v1176
  %v1288 = vpop.f32.mrf.mxu0
  %v1289 = vadd.f32 0.0, %v1288
  %1290 = vmatmul.f32.gmra.mxu0 %v1179
  %v1291 = vpop.f32.mrf.mxu0
  %v1292 = vadd.f32 0.0, %v1291
  %1293 = vmatmul.f32.gmra.mxu0 %v1182
  %v1294 = vpop.f32.mrf.mxu0
  %v1295 = vadd.f32 0.0, %v1294
  %1296 = vmatmul.f32.gmra.mxu0 %v1185
  %v1297 = vpop.f32.mrf.mxu0
  %v1298 = vadd.f32 0.0, %v1297
  %1299 = vmatmul.f32.gmra.mxu0 %v1188
  %v1300 = vpop.f32.mrf.mxu0
  %v1301 = vadd.f32 0.0, %v1300
  %1302 = vmatmul.f32.gmra.mxu0 %v1191
  %v1303 = vpop.f32.mrf.mxu0
  %v1304 = vadd.f32 0.0, %v1303
  %1305 = vmatmul.f32.gmra.mxu0 %v1194
  %v1306 = vpop.f32.mrf.mxu0
  %v1307 = vadd.f32 0.0, %v1306
  %1308 = vmatmul.f32.gmra.mxu0 %v1197
  %v1309 = vpop.f32.mrf.mxu0
  %v1310 = vadd.f32 0.0, %v1309
  %1311 = vmatmul.f32.gmra.mxu0 %v1200
  %v1312 = vpop.f32.mrf.mxu0
  %v1313 = vadd.f32 0.0, %v1312
  %1314 = vmatmul.f32.gmra.mxu0 %v1203
  %v1315 = vpop.f32.mrf.mxu0
  %v1316 = vadd.f32 0.0, %v1315
  %1317 = vmatmul.f32.gmra.mxu0 %v1206
  %v1318 = vpop.f32.mrf.mxu0
  %v1319 = vadd.f32 0.0, %v1318
  %1320 = vmatmul.f32.gmra.mxu0 %v1209
  %v1321 = vpop.f32.mrf.mxu0
  %v1322 = vadd.f32 0.0, %v1321
  %1323 = vmatmul.f32.gmra.mxu0 %v1212
  %v1324 = vpop.f32.mrf.mxu0
  %v1325 = vadd.f32 0.0, %v1324
  %1326 = vmatmul.f32.gmra.mxu0 %v1215
  %v1327 = vpop.f32.mrf.mxu0
  %v1328 = vadd.f32 0.0, %v1327
  %1329 = vmatmul.f32.gmra.mxu0 %v1218
  %v1330 = vpop.f32.mrf.mxu0
  %v1331 = vadd.f32 0.0, %v1330
  %1332 = vmatmul.f32.gmra.mxu0 %v1221
  %v1333 = vpop.f32.mrf.mxu0
  %v1334 = vadd.f32 0.0, %v1333
  %1335 = vmatmul.f32.gmra.mxu0 %v1224
  %v1336 = vpop.f32.mrf.mxu0
  %v1337 = vadd.f32 0.0, %v1336
  %1338 = vmatmul.f32.gmra.mxu0 %v1227
  %v1339 = vpop.f32.mrf.mxu0
  %v1340 = vadd.f32 0.0, %v1339
  %1341 = vmatmul.f32.gmra.mxu0 %v1230
  %v1342 = vpop.f32.mrf.mxu0
  %v1343 = vadd.f32 0.0, %v1342
  %1344 = vdwg.mxu0
  %v1345 = vadd.f32 %v999, %v1250
  %v1346 = vadd.f32 %v1000, %v1253
  %v1347 = vadd.f32 %v1001, %v1256
  %v1348 = vadd.f32 %v1002, %v1259
  %v1349 = vadd.f32 %v1003, %v1262
  %v1350 = vadd.f32 %v1004, %v1265
  %v1351 = vadd.f32 %v1005, %v1268
  %v1352 = vadd.f32 %v1006, %v1271
  %v1353 = vadd.f32 %v1007, %v1274
  %v1354 = vadd.f32 %v1008, %v1277
  %v1355 = vadd.f32 %v1009, %v1280
  %v1356 = vadd.f32 %v1010, %v1283
  %v1357 = vadd.f32 %v1011, %v1286
  %v1358 = vadd.f32 %v1012, %v1289
  %v1359 = vadd.f32 %v1013, %v1292
  %v1360 = vadd.f32 %v1014, %v1295
  %v1361 = vadd.f32 %v1015, %v1298
  %v1362 = vadd.f32 %v1016, %v1301
  %v1363 = vadd.f32 %v1017, %v1304
  %v1364 = vadd.f32 %v1018, %v1307
  %v1365 = vadd.f32 %v1019, %v1310
  %v1366 = vadd.f32 %v1020, %v1313
  %v1367 = vadd.f32 %v1021, %v1316
  %v1368 = vadd.f32 %v1022, %v1319
  %v1369 = vadd.f32 %v1023, %v1322
  %v1370 = vadd.f32 %v1024, %v1325
  %v1371 = vadd.f32 %v1025, %v1328
  %v1372 = vadd.f32 %v1026, %v1331
  %v1373 = vadd.f32 %v1027, %v1334
  %v1374 = vadd.f32 %v1028, %v1337
  %v1375 = vadd.f32 %v1029, %v1340
  %v1376 = vadd.f32 %v1030, %v1343
  %v1377 = vld [vmem:[%s3] sm:$0xff]
  %v1378 = vld [vmem:[%s3 + $0x8] sm:$0xff]
  %v1379 = vld [vmem:[%s3 + $0x10] sm:$0xff]
  %v1380 = vld [vmem:[%s3 + $0x18] sm:$0xff]
  %v1381 = vld [vmem:[%s3 + $0x20] sm:$0xff]
  %v1382 = vld [vmem:[%s3 + $0x28] sm:$0xff]
  %v1383 = vld [vmem:[%s3 + $0x30] sm:$0xff]
  %v1384 = vld [vmem:[%s3 + $0x38] sm:$0xff]
  %v1385 = vld [vmem:[%s3 + $0x40] sm:$0xff]
  %v1386 = vld [vmem:[%s3 + $0x48] sm:$0xff]
  %v1387 = vld [vmem:[%s3 + $0x50] sm:$0xff]
  %v1388 = vld [vmem:[%s3 + $0x58] sm:$0xff]
  %v1389 = vld [vmem:[%s3 + $0x60] sm:$0xff]
  %v1390 = vld [vmem:[%s3 + $0x68] sm:$0xff]
  %v1391 = vld [vmem:[%s3 + $0x70] sm:$0xff]
  %v1392 = vld [vmem:[%s3 + $0x78] sm:$0xff]
  %v1393 = vld [vmem:[%s3 + $0x80] sm:$0xff]
  %v1394 = vld [vmem:[%s3 + $0x88] sm:$0xff]
  %v1395 = vld [vmem:[%s3 + $0x90] sm:$0xff]
  %v1396 = vld [vmem:[%s3 + $0x98] sm:$0xff]
  %v1397 = vld [vmem:[%s3 + $0xa0] sm:$0xff]
  %v1398 = vld [vmem:[%s3 + $0xa8] sm:$0xff]
  %v1399 = vld [vmem:[%s3 + $0xb0] sm:$0xff]
  %v1400 = vld [vmem:[%s3 + $0xb8] sm:$0xff]
  %v1401 = vld [vmem:[%s3 + $0xc0] sm:$0xff]
  %v1402 = vld [vmem:[%s3 + $0xc8] sm:$0xff]
  %v1403 = vld [vmem:[%s3 + $0xd0] sm:$0xff]
  %v1404 = vld [vmem:[%s3 + $0xd8] sm:$0xff]
  %v1405 = vld [vmem:[%s3 + $0xe0] sm:$0xff]
  %v1406 = vld [vmem:[%s3 + $0xe8] sm:$0xff]
  %v1407 = vld [vmem:[%s3 + $0xf0] sm:$0xff]
  %v1408 = vld [vmem:[%s3 + $0xf8] sm:$0xff]
  %1410 = vset.pattern.permute.xlu0 0
  %1411 = vperm.xlu0 %1410, %v1377
  %v1412 = vpop.permute.xlu0 %1411
  %1415 = vset.pattern.permute.xlu0 0
  %1416 = vperm.xlu0 %1415, %v1378
  %v1417 = vpop.permute.xlu0 %1416
  %1420 = vset.pattern.permute.xlu0 0
  %1421 = vperm.xlu0 %1420, %v1379
  %v1422 = vpop.permute.xlu0 %1421
  %1425 = vset.pattern.permute.xlu0 0
  %1426 = vperm.xlu0 %1425, %v1380
  %v1427 = vpop.permute.xlu0 %1426
  %1430 = vset.pattern.permute.xlu0 0
  %1431 = vperm.xlu0 %1430, %v1381
  %v1432 = vpop.permute.xlu0 %1431
  %1435 = vset.pattern.permute.xlu0 0
  %1436 = vperm.xlu0 %1435, %v1382
  %v1437 = vpop.permute.xlu0 %1436
  %1440 = vset.pattern.permute.xlu0 0
  %1441 = vperm.xlu0 %1440, %v1383
  %v1442 = vpop.permute.xlu0 %1441
  %1445 = vset.pattern.permute.xlu0 0
  %1446 = vperm.xlu0 %1445, %v1384
  %v1447 = vpop.permute.xlu0 %1446
  %1450 = vset.pattern.permute.xlu0 0
  %1451 = vperm.xlu0 %1450, %v1385
  %v1452 = vpop.permute.xlu0 %1451
  %1455 = vset.pattern.permute.xlu0 0
  %1456 = vperm.xlu0 %1455, %v1386
  %v1457 = vpop.permute.xlu0 %1456
  %1460 = vset.pattern.permute.xlu0 0
  %1461 = vperm.xlu0 %1460, %v1387
  %v1462 = vpop.permute.xlu0 %1461
  %1465 = vset.pattern.permute.xlu0 0
  %1466 = vperm.xlu0 %1465, %v1388
  %v1467 = vpop.permute.xlu0 %1466
  %1470 = vset.pattern.permute.xlu0 0
  %1471 = vperm.xlu0 %1470, %v1389
  %v1472 = vpop.permute.xlu0 %1471
  %1475 = vset.pattern.permute.xlu0 0
  %1476 = vperm.xlu0 %1475, %v1390
  %v1477 = vpop.permute.xlu0 %1476
  %1480 = vset.pattern.permute.xlu0 0
  %1481 = vperm.xlu0 %1480, %v1391
  %v1482 = vpop.permute.xlu0 %1481
  %1485 = vset.pattern.permute.xlu0 0
  %1486 = vperm.xlu0 %1485, %v1392
  %v1487 = vpop.permute.xlu0 %1486
  %1490 = vset.pattern.permute.xlu0 0
  %1491 = vperm.xlu0 %1490, %v1393
  %v1492 = vpop.permute.xlu0 %1491
  %1495 = vset.pattern.permute.xlu0 0
  %1496 = vperm.xlu0 %1495, %v1394
  %v1497 = vpop.permute.xlu0 %1496
  %1500 = vset.pattern.permute.xlu0 0
  %1501 = vperm.xlu0 %1500, %v1395
  %v1502 = vpop.permute.xlu0 %1501
  %1505 = vset.pattern.permute.xlu0 0
  %1506 = vperm.xlu0 %1505, %v1396
  %v1507 = vpop.permute.xlu0 %1506
  %1510 = vset.pattern.permute.xlu0 0
  %1511 = vperm.xlu0 %1510, %v1397
  %v1512 = vpop.permute.xlu0 %1511
  %1515 = vset.pattern.permute.xlu0 0
  %1516 = vperm.xlu0 %1515, %v1398
  %v1517 = vpop.permute.xlu0 %1516
  %1520 = vset.pattern.permute.xlu0 0
  %1521 = vperm.xlu0 %1520, %v1399
  %v1522 = vpop.permute.xlu0 %1521
  %1525 = vset.pattern.permute.xlu0 0
  %1526 = vperm.xlu0 %1525, %v1400
  %v1527 = vpop.permute.xlu0 %1526
  %1530 = vset.pattern.permute.xlu0 0
  %1531 = vperm.xlu0 %1530, %v1401
  %v1532 = vpop.permute.xlu0 %1531
  %1535 = vset.pattern.permute.xlu0 0
  %1536 = vperm.xlu0 %1535, %v1402
  %v1537 = vpop.permute.xlu0 %1536
  %1540 = vset.pattern.permute.xlu0 0
  %1541 = vperm.xlu0 %1540, %v1403
  %v1542 = vpop.permute.xlu0 %1541
  %1545 = vset.pattern.permute.xlu0 0
  %1546 = vperm.xlu0 %1545, %v1404
  %v1547 = vpop.permute.xlu0 %1546
  %1550 = vset.pattern.permute.xlu0 0
  %1551 = vperm.xlu0 %1550, %v1405
  %v1552 = vpop.permute.xlu0 %1551
  %1555 = vset.pattern.permute.xlu0 0
  %1556 = vperm.xlu0 %1555, %v1406
  %v1557 = vpop.permute.xlu0 %1556
  %1560 = vset.pattern.permute.xlu0 0
  %1561 = vperm.xlu0 %1560, %v1407
  %v1562 = vpop.permute.xlu0 %1561
  %1565 = vset.pattern.permute.xlu0 0
  %1566 = vperm.xlu0 %1565, %v1408
  %v1567 = vpop.permute.xlu0 %1566
  %v1569 = vadd.f32 %v1345, %v1412
  %v1570 = vadd.f32 %v1346, %v1417
  %v1571 = vadd.f32 %v1347, %v1422
  %v1572 = vadd.f32 %v1348, %v1427
  %v1573 = vadd.f32 %v1349, %v1432
  %v1574 = vadd.f32 %v1350, %v1437
  %v1575 = vadd.f32 %v1351, %v1442
  %v1576 = vadd.f32 %v1352, %v1447
  %v1577 = vadd.f32 %v1353, %v1452
  %v1578 = vadd.f32 %v1354, %v1457
  %v1579 = vadd.f32 %v1355, %v1462
  %v1580 = vadd.f32 %v1356, %v1467
  %v1581 = vadd.f32 %v1357, %v1472
  %v1582 = vadd.f32 %v1358, %v1477
  %v1583 = vadd.f32 %v1359, %v1482
  %v1584 = vadd.f32 %v1360, %v1487
  %v1585 = vadd.f32 %v1361, %v1492
  %v1586 = vadd.f32 %v1362, %v1497
  %v1587 = vadd.f32 %v1363, %v1502
  %v1588 = vadd.f32 %v1364, %v1507
  %v1589 = vadd.f32 %v1365, %v1512
  %v1590 = vadd.f32 %v1366, %v1517
  %v1591 = vadd.f32 %v1367, %v1522
  %v1592 = vadd.f32 %v1368, %v1527
  %v1593 = vadd.f32 %v1369, %v1532
  %v1594 = vadd.f32 %v1370, %v1537
  %v1595 = vadd.f32 %v1371, %v1542
  %v1596 = vadd.f32 %v1372, %v1547
  %v1597 = vadd.f32 %v1373, %v1552
  %v1598 = vadd.f32 %v1374, %v1557
  %v1599 = vadd.f32 %v1375, %v1562
  %v1600 = vadd.f32 %v1376, %v1567
  %v1601 = vmax.f32 %v1569, 0.0
  %v1602 = vmax.f32 %v1570, 0.0
  %v1603 = vmax.f32 %v1571, 0.0
  %v1604 = vmax.f32 %v1572, 0.0
  %v1605 = vmax.f32 %v1573, 0.0
  %v1606 = vmax.f32 %v1574, 0.0
  %v1607 = vmax.f32 %v1575, 0.0
  %v1608 = vmax.f32 %v1576, 0.0
  %v1609 = vmax.f32 %v1577, 0.0
  %v1610 = vmax.f32 %v1578, 0.0
  %v1611 = vmax.f32 %v1579, 0.0
  %v1612 = vmax.f32 %v1580, 0.0
  %v1613 = vmax.f32 %v1581, 0.0
  %v1614 = vmax.f32 %v1582, 0.0
  %v1615 = vmax.f32 %v1583, 0.0
  %v1616 = vmax.f32 %v1584, 0.0
  %v1617 = vmax.f32 %v1585, 0.0
  %v1618 = vmax.f32 %v1586, 0.0
  %v1619 = vmax.f32 %v1587, 0.0
  %v1620 = vmax.f32 %v1588, 0.0
  %v1621 = vmax.f32 %v1589, 0.0
  %v1622 = vmax.f32 %v1590, 0.0
  %v1623 = vmax.f32 %v1591, 0.0
  %v1624 = vmax.f32 %v1592, 0.0
  %v1625 = vmax.f32 %v1593, 0.0
  %v1626 = vmax.f32 %v1594, 0.0
  %v1627 = vmax.f32 %v1595, 0.0
  %v1628 = vmax.f32 %v1596, 0.0
  %v1629 = vmax.f32 %v1597, 0.0
  %v1630 = vmax.f32 %v1598, 0.0
  %v1631 = vmax.f32 %v1599, 0.0
  %v1632 = vmax.f32 %v1600, 0.0
  %v1633 = vld [vmem:[%s4] sm:$0xff]
  %v1634 = vld [vmem:[%s4 + $0x8] sm:$0xff]
  %v1635 = vld [vmem:[%s4 + $0x10] sm:$0xff]
  %v1636 = vld [vmem:[%s4 + $0x18] sm:$0xff]
  %v1637 = vld [vmem:[%s4 + $0x20] sm:$0xff]
  %v1638 = vld [vmem:[%s4 + $0x28] sm:$0xff]
  %v1639 = vld [vmem:[%s4 + $0x30] sm:$0xff]
  %v1640 = vld [vmem:[%s4 + $0x38] sm:$0xff]
  %v1641 = vld [vmem:[%s4 + $0x40] sm:$0xff]
  %v1642 = vld [vmem:[%s4 + $0x48] sm:$0xff]
  %v1643 = vld [vmem:[%s4 + $0x50] sm:$0xff]
  %v1644 = vld [vmem:[%s4 + $0x58] sm:$0xff]
  %v1645 = vld [vmem:[%s4 + $0x60] sm:$0xff]
  %v1646 = vld [vmem:[%s4 + $0x68] sm:$0xff]
  %v1647 = vld [vmem:[%s4 + $0x70] sm:$0xff]
  %v1648 = vld [vmem:[%s4 + $0x78] sm:$0xff]
  %v1649 = vld [vmem:[%s4 + $0x80] sm:$0xff]
  %v1650 = vld [vmem:[%s4 + $0x88] sm:$0xff]
  %v1651 = vld [vmem:[%s4 + $0x90] sm:$0xff]
  %v1652 = vld [vmem:[%s4 + $0x98] sm:$0xff]
  %v1653 = vld [vmem:[%s4 + $0xa0] sm:$0xff]
  %v1654 = vld [vmem:[%s4 + $0xa8] sm:$0xff]
  %v1655 = vld [vmem:[%s4 + $0xb0] sm:$0xff]
  %v1656 = vld [vmem:[%s4 + $0xb8] sm:$0xff]
  %v1657 = vld [vmem:[%s4 + $0xc0] sm:$0xff]
  %v1658 = vld [vmem:[%s4 + $0xc8] sm:$0xff]
  %v1659 = vld [vmem:[%s4 + $0xd0] sm:$0xff]
  %v1660 = vld [vmem:[%s4 + $0xd8] sm:$0xff]
  %v1661 = vld [vmem:[%s4 + $0xe0] sm:$0xff]
  %v1662 = vld [vmem:[%s4 + $0xe8] sm:$0xff]
  %v1663 = vld [vmem:[%s4 + $0xf0] sm:$0xff]
  %v1664 = vld [vmem:[%s4 + $0xf8] sm:$0xff]
  %v1665 = vld [vmem:[%s5] sm:$0xff]
  %v1666 = vld [vmem:[%s5 + $0x8] sm:$0xff]
  %v1667 = vld [vmem:[%s5 + $0x10] sm:$0xff]
  %v1668 = vld [vmem:[%s5 + $0x18] sm:$0xff]
  %v1669 = vld [vmem:[%s5 + $0x20] sm:$0xff]
  %v1670 = vld [vmem:[%s5 + $0x28] sm:$0xff]
  %v1671 = vld [vmem:[%s5 + $0x30] sm:$0xff]
  %v1672 = vld [vmem:[%s5 + $0x38] sm:$0xff]
  %v1673 = vld [vmem:[%s5 + $0x40] sm:$0xff]
  %v1674 = vld [vmem:[%s5 + $0x48] sm:$0xff]
  %v1675 = vld [vmem:[%s5 + $0x50] sm:$0xff]
  %v1676 = vld [vmem:[%s5 + $0x58] sm:$0xff]
  %v1677 = vld [vmem:[%s5 + $0x60] sm:$0xff]
  %v1678 = vld [vmem:[%s5 + $0x68] sm:$0xff]
  %v1679 = vld [vmem:[%s5 + $0x70] sm:$0xff]
  %v1680 = vld [vmem:[%s5 + $0x78] sm:$0xff]
  %1682 = vset.pattern.permute.xlu0 0
  %1683 = vperm.xlu0 %1682, %v1665
  %v1684 = vpop.permute.xlu0 %1683
  %1687 = vset.pattern.permute.xlu0 0
  %1688 = vperm.xlu0 %1687, %v1666
  %v1689 = vpop.permute.xlu0 %1688
  %1692 = vset.pattern.permute.xlu0 0
  %1693 = vperm.xlu0 %1692, %v1667
  %v1694 = vpop.permute.xlu0 %1693
  %1697 = vset.pattern.permute.xlu0 0
  %1698 = vperm.xlu0 %1697, %v1668
  %v1699 = vpop.permute.xlu0 %1698
  %1702 = vset.pattern.permute.xlu0 0
  %1703 = vperm.xlu0 %1702, %v1669
  %v1704 = vpop.permute.xlu0 %1703
  %1707 = vset.pattern.permute.xlu0 0
  %1708 = vperm.xlu0 %1707, %v1670
  %v1709 = vpop.permute.xlu0 %1708
  %1712 = vset.pattern.permute.xlu0 0
  %1713 = vperm.xlu0 %1712, %v1671
  %v1714 = vpop.permute.xlu0 %1713
  %1717 = vset.pattern.permute.xlu0 0
  %1718 = vperm.xlu0 %1717, %v1672
  %v1719 = vpop.permute.xlu0 %1718
  %1722 = vset.pattern.permute.xlu0 0
  %1723 = vperm.xlu0 %1722, %v1673
  %v1724 = vpop.permute.xlu0 %1723
  %1727 = vset.pattern.permute.xlu0 0
  %1728 = vperm.xlu0 %1727, %v1674
  %v1729 = vpop.permute.xlu0 %1728
  %1732 = vset.pattern.permute.xlu0 0
  %1733 = vperm.xlu0 %1732, %v1675
  %v1734 = vpop.permute.xlu0 %1733
  %1737 = vset.pattern.permute.xlu0 0
  %1738 = vperm.xlu0 %1737, %v1676
  %v1739 = vpop.permute.xlu0 %1738
  %1742 = vset.pattern.permute.xlu0 0
  %1743 = vperm.xlu0 %1742, %v1677
  %v1744 = vpop.permute.xlu0 %1743
  %1747 = vset.pattern.permute.xlu0 0
  %1748 = vperm.xlu0 %1747, %v1678
  %v1749 = vpop.permute.xlu0 %1748
  %1752 = vset.pattern.permute.xlu0 0
  %1753 = vperm.xlu0 %1752, %v1679
  %v1754 = vpop.permute.xlu0 %1753
  %1757 = vset.pattern.permute.xlu0 0
  %1758 = vperm.xlu0 %1757, %v1680
  %v1759 = vpop.permute.xlu0 %1758
  %1761 = vmatpush.msra.mxu0 %v1616
  %1762 = vmatpush.msra.mxu0 %v1615
  %1763 = vmatpush.msra.mxu0 %v1614
  %1764 = vmatpush.msra.mxu0 %v1613
  %1765 = vmatpush.msra.mxu0 %v1612
  %1766 = vmatpush.msra.mxu0 %v1611
  %1767 = vmatpush.msra.mxu0 %v1610
  %1768 = vmatpush.msra.mxu0 %v1609
  %1769 = vmatpush.msra.mxu0 %v1608
  %1770 = vmatpush.msra.mxu0 %v1607
  %1771 = vmatpush.msra.mxu0 %v1606
  %1772 = vmatpush.msra.mxu0 %v1605
  %1773 = vmatpush.msra.mxu0 %v1604
  %1774 = vmatpush.msra.mxu0 %v1603
  %1775 = vmatpush.msra.mxu0 %v1602
  %1776 = vmatpush.msra.mxu0 %v1601
  %1777 = vmatmul.f32.gmra.mxu0 %v1633
  %v1778 = vpop.f32.mrf.mxu0
  %v1779 = vadd.f32 %v1684, %v1778
  %1780 = vmatmul.f32.gmra.mxu0 %v1635
  %v1781 = vpop.f32.mrf.mxu0
  %v1782 = vadd.f32 %v1689, %v1781
  %1783 = vmatmul.f32.gmra.mxu0 %v1637
  %v1784 = vpop.f32.mrf.mxu0
  %v1785 = vadd.f32 %v1694, %v1784
  %1786 = vmatmul.f32.gmra.mxu0 %v1639
  %v1787 = vpop.f32.mrf.mxu0
  %v1788 = vadd.f32 %v1699, %v1787
  %1789 = vmatmul.f32.gmra.mxu0 %v1641
  %v1790 = vpop.f32.mrf.mxu0
  %v1791 = vadd.f32 %v1704, %v1790
  %1792 = vmatmul.f32.gmra.mxu0 %v1643
  %v1793 = vpop.f32.mrf.mxu0
  %v1794 = vadd.f32 %v1709, %v1793
  %1795 = vmatmul.f32.gmra.mxu0 %v1645
  %v1796 = vpop.f32.mrf.mxu0
  %v1797 = vadd.f32 %v1714, %v1796
  %1798 = vmatmul.f32.gmra.mxu0 %v1647
  %v1799 = vpop.f32.mrf.mxu0
  %v1800 = vadd.f32 %v1719, %v1799
  %1801 = vmatmul.f32.gmra.mxu0 %v1649
  %v1802 = vpop.f32.mrf.mxu0
  %v1803 = vadd.f32 %v1724, %v1802
  %1804 = vmatmul.f32.gmra.mxu0 %v1651
  %v1805 = vpop.f32.mrf.mxu0
  %v1806 = vadd.f32 %v1729, %v1805
  %1807 = vmatmul.f32.gmra.mxu0 %v1653
  %v1808 = vpop.f32.mrf.mxu0
  %v1809 = vadd.f32 %v1734, %v1808
  %1810 = vmatmul.f32.gmra.mxu0 %v1655
  %v1811 = vpop.f32.mrf.mxu0
  %v1812 = vadd.f32 %v1739, %v1811
  %1813 = vmatmul.f32.gmra.mxu0 %v1657
  %v1814 = vpop.f32.mrf.mxu0
  %v1815 = vadd.f32 %v1744, %v1814
  %1816 = vmatmul.f32.gmra.mxu0 %v1659
  %v1817 = vpop.f32.mrf.mxu0
  %v1818 = vadd.f32 %v1749, %v1817
  %1819 = vmatmul.f32.gmra.mxu0 %v1661
  %v1820 = vpop.f32.mrf.mxu0
  %v1821 = vadd.f32 %v1754, %v1820
  %1822 = vmatmul.f32.gmra.mxu0 %v1663
  %v1823 = vpop.f32.mrf.mxu0
  %v1824 = vadd.f32 %v1759, %v1823
  %1825 = vdwg.mxu0
  %1826 = vmatpush.msra.mxu0 %v1632
  %1827 = vmatpush.msra.mxu0 %v1631
  %1828 = vmatpush.msra.mxu0 %v1630
  %1829 = vmatpush.msra.mxu0 %v1629
  %1830 = vmatpush.msra.mxu0 %v1628
  %1831 = vmatpush.msra.mxu0 %v1627
  %1832 = vmatpush.msra.mxu0 %v1626
  %1833 = vmatpush.msra.mxu0 %v1625
  %1834 = vmatpush.msra.mxu0 %v1624
  %1835 = vmatpush.msra.mxu0 %v1623
  %1836 = vmatpush.msra.mxu0 %v1622
  %1837 = vmatpush.msra.mxu0 %v1621
  %1838 = vmatpush.msra.mxu0 %v1620
  %1839 = vmatpush.msra.mxu0 %v1619
  %1840 = vmatpush.msra.mxu0 %v1618
  %1841 = vmatpush.msra.mxu0 %v1617
  %1842 = vmatmul.f32.gmra.mxu0 %v1634
  %v1843 = vpop.f32.mrf.mxu0
  %v1844 = vadd.f32 %v1779, %v1843
  %1845 = vmatmul.f32.gmra.mxu0 %v1636
  %v1846 = vpop.f32.mrf.mxu0
  %v1847 = vadd.f32 %v1782, %v1846
  %1848 = vmatmul.f32.gmra.mxu0 %v1638
  %v1849 = vpop.f32.mrf.mxu0
  %v1850 = vadd.f32 %v1785, %v1849
  %1851 = vmatmul.f32.gmra.mxu0 %v1640
  %v1852 = vpop.f32.mrf.mxu0
  %v1853 = vadd.f32 %v1788, %v1852
  %1854 = vmatmul.f32.gmra.mxu0 %v1642
  %v1855 = vpop.f32.mrf.mxu0
  %v1856 = vadd.f32 %v1791, %v1855
  %1857 = vmatmul.f32.gmra.mxu0 %v1644
  %v1858 = vpop.f32.mrf.mxu0
  %v1859 = vadd.f32 %v1794, %v1858
  %1860 = vmatmul.f32.gmra.mxu0 %v1646
  %v1861 = vpop.f32.mrf.mxu0
  %v1862 = vadd.f32 %v1797, %v1861
  %1863 = vmatmul.f32.gmra.mxu0 %v1648
  %v1864 = vpop.f32.mrf.mxu0
  %v1865 = vadd.f32 %v1800, %v1864
  %1866 = vmatmul.f32.gmra.mxu0 %v1650
  %v1867 = vpop.f32.mrf.mxu0
  %v1868 = vadd.f32 %v1803, %v1867
  %1869 = vmatmul.f32.gmra.mxu0 %v1652
  %v1870 = vpop.f32.mrf.mxu0
  %v1871 = vadd.f32 %v1806, %v1870
  %1872 = vmatmul.f32.gmra.mxu0 %v1654
  %v1873 = vpop.f32.mrf.mxu0
  %v1874 = vadd.f32 %v1809, %v1873
  %1875 = vmatmul.f32.gmra.mxu0 %v1656
  %v1876 = vpop.f32.mrf.mxu0
  %v1877 = vadd.f32 %v1812, %v1876
  %1878 = vmatmul.f32.gmra.mxu0 %v1658
  %v1879 = vpop.f32.mrf.mxu0
  %v1880 = vadd.f32 %v1815, %v1879
  %1881 = vmatmul.f32.gmra.mxu0 %v1660
  %v1882 = vpop.f32.mrf.mxu0
  %v1883 = vadd.f32 %v1818, %v1882
  %1884 = vmatmul.f32.gmra.mxu0 %v1662
  %v1885 = vpop.f32.mrf.mxu0
  %v1886 = vadd.f32 %v1821, %v1885
  %1887 = vmatmul.f32.gmra.mxu0 %v1664
  %v1888 = vpop.f32.mrf.mxu0
  %v1889 = vadd.f32 %v1824, %v1888
  %1890 = vdwg.mxu0
  %v1891 = vmax.f32 %v1844, 0.0
  %v1892 = vmax.f32 %v1847, 0.0
  %v1893 = vmax.f32 %v1850, 0.0
  %v1894 = vmax.f32 %v1853, 0.0
  %v1895 = vmax.f32 %v1856, 0.0
  %v1896 = vmax.f32 %v1859, 0.0
  %v1897 = vmax.f32 %v1862, 0.0
  %v1898 = vmax.f32 %v1865, 0.0
  %v1899 = vmax.f32 %v1868, 0.0
  %v1900 = vmax.f32 %v1871, 0.0
  %v1901 = vmax.f32 %v1874, 0.0
  %v1902 = vmax.f32 %v1877, 0.0
  %v1903 = vmax.f32 %v1880, 0.0
  %v1904 = vmax.f32 %v1883, 0.0
  %v1905 = vmax.f32 %v1886, 0.0
  %v1906 = vmax.f32 %v1889, 0.0
  %v1907 = vld [vmem:[%s6] sm:$0xff]
  %v1908 = vld [vmem:[%s6 + $0x8] sm:$0xff]
  %v1909 = vld [vmem:[%s6 + $0x10] sm:$0xff]
  %v1910 = vld [vmem:[%s6 + $0x18] sm:$0xff]
  %v1911 = vld [vmem:[%s6 + $0x20] sm:$0xff]
  %v1912 = vld [vmem:[%s6 + $0x28] sm:$0xff]
  %v1913 = vld [vmem:[%s6 + $0x30] sm:$0xff]
  %v1914 = vld [vmem:[%s6 + $0x38] sm:$0xff]
  %v1915 = vld [vmem:[%s7] sm:$0xff]
  %v1916 = vld [vmem:[%s7 + $0x8] sm:$0xff]
  %v1917 = vld [vmem:[%s7 + $0x10] sm:$0xff]
  %v1918 = vld [vmem:[%s7 + $0x18] sm:$0xff]
  %v1919 = vld [vmem:[%s7 + $0x20] sm:$0xff]
  %v1920 = vld [vmem:[%s7 + $0x28] sm:$0xff]
  %v1921 = vld [vmem:[%s7 + $0x30] sm:$0xff]
  %v1922 = vld [vmem:[%s7 + $0x38] sm:$0xff]
  %1924 = vset.pattern.permute.xlu0 0
  %1925 = vperm.xlu0 %1924, %v1915
  %v1926 = vpop.permute.xlu0 %1925
  %1929 = vset.pattern.permute.xlu0 0
  %1930 = vperm.xlu0 %1929, %v1916
  %v1931 = vpop.permute.xlu0 %1930
  %1934 = vset.pattern.permute.xlu0 0
  %1935 = vperm.xlu0 %1934, %v1917
  %v1936 = vpop.permute.xlu0 %1935
  %1939 = vset.pattern.permute.xlu0 0
  %1940 = vperm.xlu0 %1939, %v1918
  %v1941 = vpop.permute.xlu0 %1940
  %1944 = vset.pattern.permute.xlu0 0
  %1945 = vperm.xlu0 %1944, %v1919
  %v1946 = vpop.permute.xlu0 %1945
  %1949 = vset.pattern.permute.xlu0 0
  %1950 = vperm.xlu0 %1949, %v1920
  %v1951 = vpop.permute.xlu0 %1950
  %1954 = vset.pattern.permute.xlu0 0
  %1955 = vperm.xlu0 %1954, %v1921
  %v1956 = vpop.permute.xlu0 %1955
  %1959 = vset.pattern.permute.xlu0 0
  %1960 = vperm.xlu0 %1959, %v1922
  %v1961 = vpop.permute.xlu0 %1960
  %1963 = vmatpush.msra.mxu0 %v1906
  %1964 = vmatpush.msra.mxu0 %v1905
  %1965 = vmatpush.msra.mxu0 %v1904
  %1966 = vmatpush.msra.mxu0 %v1903
  %1967 = vmatpush.msra.mxu0 %v1902
  %1968 = vmatpush.msra.mxu0 %v1901
  %1969 = vmatpush.msra.mxu0 %v1900
  %1970 = vmatpush.msra.mxu0 %v1899
  %1971 = vmatpush.msra.mxu0 %v1898
  %1972 = vmatpush.msra.mxu0 %v1897
  %1973 = vmatpush.msra.mxu0 %v1896
  %1974 = vmatpush.msra.mxu0 %v1895
  %1975 = vmatpush.msra.mxu0 %v1894
  %1976 = vmatpush.msra.mxu0 %v1893
  %1977 = vmatpush.msra.mxu0 %v1892
  %1978 = vmatpush.msra.mxu0 %v1891
  %1979 = vmatmul.f32.gmra.mxu0 %v1907
  %v1980 = vpop.f32.mrf.mxu0
  %v1981 = vadd.f32 %v1926, %v1980
  %1982 = vmatmul.f32.gmra.mxu0 %v1908
  %v1983 = vpop.f32.mrf.mxu0
  %v1984 = vadd.f32 %v1931, %v1983
  %1985 = vmatmul.f32.gmra.mxu0 %v1909
  %v1986 = vpop.f32.mrf.mxu0
  %v1987 = vadd.f32 %v1936, %v1986
  %1988 = vmatmul.f32.gmra.mxu0 %v1910
  %v1989 = vpop.f32.mrf.mxu0
  %v1990 = vadd.f32 %v1941, %v1989
  %1991 = vmatmul.f32.gmra.mxu0 %v1911
  %v1992 = vpop.f32.mrf.mxu0
  %v1993 = vadd.f32 %v1946, %v1992
  %1994 = vmatmul.f32.gmra.mxu0 %v1912
  %v1995 = vpop.f32.mrf.mxu0
  %v1996 = vadd.f32 %v1951, %v1995
  %1997 = vmatmul.f32.gmra.mxu0 %v1913
  %v1998 = vpop.f32.mrf.mxu0
  %v1999 = vadd.f32 %v1956, %v1998
  %2000 = vmatmul.f32.gmra.mxu0 %v1914
  %v2001 = vpop.f32.mrf.mxu0
  %v2002 = vadd.f32 %v1961, %v2001
  %2003 = vdwg.mxu0
  %v2004 = vmax.f32 %v1981, 0.0
  %v2005 = vmax.f32 %v1984, 0.0
  %v2006 = vmax.f32 %v1987, 0.0
  %v2007 = vmax.f32 %v1990, 0.0
  %v2008 = vmax.f32 %v1993, 0.0
  %v2009 = vmax.f32 %v1996, 0.0
  %v2010 = vmax.f32 %v1999, 0.0
  %v2011 = vmax.f32 %v2002, 0.0
  %v2012 = vld [vmem:[%s8] sm:$0xff]
  %v2013 = vld [vmem:[%s8 + $0x8] sm:$0xff]
  %v2014 = vld [vmem:[%s8 + $0x10] sm:$0xff]
  %v2015 = vld [vmem:[%s8 + $0x18] sm:$0xff]
  %v2016 = vld [vmem:[%s8 + $0x20] sm:$0xff]
  %v2017 = vld [vmem:[%s8 + $0x28] sm:$0xff]
  %v2018 = vld [vmem:[%s8 + $0x30] sm:$0xff]
  %v2019 = vld [vmem:[%s8 + $0x38] sm:$0xff]
  %2021 = vset.pattern.permute.xlu0 0
  %2022 = vperm.xlu0 %2021, %v2012
  %v2023 = vpop.permute.xlu0 %2022
  %2026 = vset.pattern.permute.xlu0 0
  %2027 = vperm.xlu0 %2026, %v2013
  %v2028 = vpop.permute.xlu0 %2027
  %2031 = vset.pattern.permute.xlu0 0
  %2032 = vperm.xlu0 %2031, %v2014
  %v2033 = vpop.permute.xlu0 %2032
  %2036 = vset.pattern.permute.xlu0 0
  %2037 = vperm.xlu0 %2036, %v2015
  %v2038 = vpop.permute.xlu0 %2037
  %2041 = vset.pattern.permute.xlu0 0
  %2042 = vperm.xlu0 %2041, %v2016
  %v2043 = vpop.permute.xlu0 %2042
  %2046 = vset.pattern.permute.xlu0 0
  %2047 = vperm.xlu0 %2046, %v2017
  %v2048 = vpop.permute.xlu0 %2047
  %2051 = vset.pattern.permute.xlu0 0
  %2052 = vperm.xlu0 %2051, %v2018
  %v2053 = vpop.permute.xlu0 %2052
  %2056 = vset.pattern.permute.xlu0 0
  %2057 = vperm.xlu0 %2056, %v2019
  %v2058 = vpop.permute.xlu0 %2057
  %v2060 = vmul.f32 %v2004, %v2023
  %v2061 = vmul.f32 %v2005, %v2028
  %v2062 = vmul.f32 %v2006, %v2033
  %v2063 = vmul.f32 %v2007, %v2038
  %v2064 = vmul.f32 %v2008, %v2043
  %v2065 = vmul.f32 %v2009, %v2048
  %v2066 = vmul.f32 %v2010, %v2053
  %v2067 = vmul.f32 %v2011, %v2058
  %v2068 = vadd.f32 %v2060, %v2061
  %v2069 = vadd.f32 %v2068, %v2062
  %v2070 = vadd.f32 %v2069, %v2063
  %v2071 = vadd.f32 %v2070, %v2064
  %v2072 = vadd.f32 %v2071, %v2065
  %v2073 = vadd.f32 %v2072, %v2066
  %v2074 = vadd.f32 %v2073, %v2067
  %v2075 = vrot.slane %v2074, 4
  %v2076 = vadd.f32 %v2074, %v2075
  %v2077 = vrot.slane %v2076, 2
  %v2078 = vadd.f32 %v2076, %v2077
  %v2079 = vrot.slane %v2078, 1
  %v2080 = vadd.f32 %v2078, %v2079
  %v2081 = vld [vmem:[#allocation2] sm:$0x1]
  %2083 = vset.pattern.permute.xlu0 0
  %2084 = vperm.xlu0 %2083, %v2081
  %v2085 = vpop.permute.xlu0 %2084
  %v2087 = vperm.slane %v2085, 0
  %v2088 = vadd.f32 %v2080, %v2087
  %2089 = vst [vmem:[%s10] sm:$0x1] %v2088
  // Predicated region
  $region42: #{fnn_forward.1} parent=0 // pred_check
    _
  $region43: #{fnn_forward.1} parent=0 // pred_check_branch
    %2091 = sbr.rel (0) target = $region45
  $region44: #{fnn_forward.1} parent=0 // pred_region
    _
  $region45: #{fnn_forward.1} parent=0 // pred_fallthru
    _
  // Predicated region
  $region46: #{fnn_forward.1} parent=0 // pred_check
    _
  $region47: #{fnn_forward.1} parent=0 // pred_check_branch
    %2093 = sbr.rel (0) target = $region49
  $region48: #{fnn_forward.1} parent=0 // pred_region
    _
  $region49: #{fnn_forward.1} parent=0 // pred_fallthru
    _

</llo_original>
